<compile_context>
chip_gen: v7x
topology: tpu7x:2x2x1
jax: 0.10.0
libtpu: 0.0.40
codegen_flags: <defaults>
</compile_context>

<pallas_src>
import functools

import jax
import jax.numpy as jnp
import numpy as np
from jax.experimental import pallas as pl
from jax.experimental.pallas import tpu as pltpu


def bilinear_matrix(in_size: int, out_size: int) -> jnp.ndarray:
    """PyTorch Upsample(mode='bilinear', align_corners=False) as a (out,in) matrix."""
    d = jnp.arange(out_size, dtype=jnp.float32)
    src = (d + 0.5) * (in_size / out_size) - 0.5
    src = jnp.maximum(src, 0.0)
    i0 = jnp.floor(src).astype(jnp.int32)
    lam = src - i0.astype(jnp.float32)
    i1 = jnp.minimum(i0 + 1, in_size - 1)
    rows = jnp.arange(out_size)
    A = jnp.zeros((out_size, in_size), dtype=jnp.float32)
    A = A.at[rows, i0].add(1.0 - lam)
    A = A.at[rows, i1].add(lam)
    return A


def merge_feature_kernel(x_ref, w_ref, b_ref, mT_ref, o_ref):
    # x_ref : (nb*56, 1024)  T-max'ed features, batch-flattened, HW padded 49->56
    # w_ref : (1024, ft)     transposed 1x1-conv weight chunk
    # b_ref : (1, ft)        conv bias chunk
    # mT_ref: (56, 169)      kron(A,A)^T with 7 zero rows for the HW pad
    # o_ref : (nb, ft, 169)  NCHW-flat output block (final transpose folded in)
    nb = o_ref.shape[0]

    # One merged conv matmul over all nb batch elements (M = nb*56): streams
    # the MXU instead of nb tiny M=49 passes; bias broadcast happens once.
    y = jnp.dot(x_ref[...], w_ref[...], preferred_element_type=jnp.float32)
    y = y + b_ref[...]                                   # (nb*56, ft)

    mT = mT_ref[...]                                     # (56, 169)
    for i in range(nb):  # short static loop; slice starts i*56 are 8-aligned
        yi = y[i * 56:(i + 1) * 56, :]                   # (56, ft), tile-aligned slice
        # Transposed upsample matmul: (ft, 169) = yi^T @ mT.  The zero rows of
        # mT cancel the 7 pad rows of yi exactly, and writing (ft, 169) folds
        # the NHWC->NCHW transpose into the kernel.
        o_ref[i] = jax.lax.dot_general(
            yi, mT, (((0,), (0,)), ((), ())),
            preferred_element_type=jnp.float32).astype(o_ref.dtype)


def merge_feature_i3d(x, conv_w, conv_b, feature_size=256, batch_block=8, f_block=128):
    """x: (B, 1024, 8, 7, 7) f32; conv_w: (F, 1024, 1, 1); conv_b: (F,).
    Returns (B, F, 13, 13) matching the PyTorch module."""
    B = x.shape[0]
    F = feature_size
    assert x.shape[1:] == (1024, 8, 7, 7)
    assert conv_w.shape == (F, 1024, 1, 1) and conv_b.shape == (F,)

    # --- XLA-side prep (HBM-bound, cheap) ------------------------------------
    # T-max on the native NCTHW layout (H,W merged by a free reshape); the
    # contiguous reshape (B,1024,49)->(B,49,1024) reproduces the torch
    # `.view(B,7,7,1024)` raw reinterpretation with no transpose copy.
    feat = jnp.max(x.reshape(B, 1024, 8, 49), axis=2).reshape(B, 49, 1024)
    # Pad HW 49 -> 56 (zero rows) so every per-batch row block is a multiple of
    # the 8-sublane tile: the kernel can then slice the merged conv output at
    # aligned offsets with no VMEM relayout, and any nb divides the batch.
    feat = jnp.pad(feat, ((0, 0), (0, 7), (0, 0))).reshape(B * 56, 1024)

    w_t = jnp.transpose(conv_w.reshape(F, 1024))         # (1024, F)
    b2 = conv_b.reshape(1, F)

    A = bilinear_matrix(7, 13)                            # (13, 7)
    # Folded separable upsample kron(A,A), transposed, with zero rows matching
    # the HW pad:  (56, 169).
    mT = jnp.pad(jnp.kron(A, A).T, ((0, 7), (0, 0)))

    # --- tiling ---------------------------------------------------------------
    # nb: largest divisor of B up to batch_block (amortizes per-step overhead,
    # merges input DMAs, and gives the merged matmul M = nb*56 rows).
    nb = max(d for d in range(1, min(batch_block, B) + 1) if B % d == 0)
    n_b = B // nb
    # F chunking: single full-F chunk when the batch grid already has >=2
    # steps; otherwise split F in two so a dual-TC chip (v7x) gets work on
    # both cores.  feat's block index is constant across the f axis, so
    # single-TC chips pay nothing extra for the split.
    if n_b >= 2 or F % f_block != 0 or F // f_block < 2:
        ft = F
    else:
        ft = f_block
    n_f = F // ft

    # VMEM (double-buffered) at nb=8, ft=256: ~9 MB -> fits default scoped
    # limits on v5e/v6e/v7x.
    out_flat = pl.pallas_call(
        merge_feature_kernel,
        out_shape=jax.ShapeDtypeStruct((B, F, 169), jnp.float32),
        grid_spec=pltpu.PrefetchScalarGridSpec(
            num_scalar_prefetch=0,
            grid=(n_f, n_b),
            in_specs=[
                pl.BlockSpec((nb * 56, 1024), lambda f, b: (b, 0)),
                pl.BlockSpec((1024, ft), lambda f, b: (0, f)),
                pl.BlockSpec((1, ft), lambda f, b: (0, f)),
                pl.BlockSpec((56, 169), lambda f, b: (0, 0)),
            ],
            out_specs=pl.BlockSpec((nb, ft, 169), lambda f, b: (b, f, 0)),
        ),
        compiler_params=pltpu.CompilerParams(
            dimension_semantics=("parallel", "parallel")),
    )(feat, w_t, b2, mT)

    # (B, F, 169) -> (B, F, 13, 13): free reshape, already NCHW.
    return out_flat.reshape(B, F, 13, 13)


def reference(x, conv_w, conv_b, feature_size=256):
    """Pure-JAX reference mirroring the PyTorch forward step by step."""
    B = x.shape[0]
    F = feature_size
    xp = jnp.transpose(x, (0, 1, 3, 4, 2))               # (B, C, H, W, T)
    m = jnp.max(xp, axis=-1)                              # (B, C, H, W)  == MaxPool1d(8)
    out1 = m.reshape(B, 7, 7, 1024)                       # torch .view reinterpretation
    W = conv_w.reshape(F, 1024)
    y = jnp.einsum('bijk,fk->bijf', out1, W) + conv_b     # 1x1 conv (NHWC)
    A = bilinear_matrix(7, 13)
    up = jnp.einsum('yi,xj,bijf->byxf', A, A, y)          # bilinear 7->13
    return jnp.transpose(up, (0, 3, 1, 2))                # NCHW


if __name__ == "__main__":
    B, F = 2, 256
    key = jax.random.PRNGKey(0)
    kx, kw, kb = jax.random.split(key, 3)

    x = jax.random.normal(kx, (B, 1024, 8, 7, 7), dtype=jnp.float32)
    conv_w = 0.02 * jax.random.normal(kw, (F, 1024, 1, 1), dtype=jnp.float32)
    conv_b = 0.02 * jax.random.normal(kb, (F,), dtype=jnp.float32)

    fn = jax.jit(functools.partial(merge_feature_i3d, feature_size=F))
    out = jax.block_until_ready(fn(x, conv_w, conv_b))
    assert out.shape == (B, F, 13, 13), out.shape

    ref = jax.block_until_ready(reference(x, conv_w, conv_b, feature_size=F))
    np.testing.assert_allclose(np.asarray(out), np.asarray(ref), rtol=1e-4, atol=1e-4)

    print("KERNEL_OK")
</pallas_src>

<mosaic_0001>
module attributes {stable_mosaic.version = 11 : i64} {
  func.func @merge_feature_kernel(%arg0: i32, %arg1: i32, %arg2: memref<112x1024xf32, #tpu.memory_space<vmem>>, %arg3: memref<1024x128xf32, #tpu.memory_space<vmem>>, %arg4: memref<1x128xf32, #tpu.memory_space<vmem>>, %arg5: memref<56x169xf32, #tpu.memory_space<vmem>>, %arg6: memref<2x128x169xf32, #tpu.memory_space<vmem>>) attributes {dimension_semantics = [#tpu.dimension_semantics<parallel>, #tpu.dimension_semantics<parallel>], iteration_bounds = array<i64: 2, 1>, scalar_prefetch = 0 : i64, scratch_operands = 0 : i64, tpu.core_type = #tpu.core_type<tc>, window_params = [{transform_indices = @transform_0, window_bounds = array<i64: 112, 1024>}, {transform_indices = @transform_1, window_bounds = array<i64: 1024, 128>}, {transform_indices = @transform_2, window_bounds = array<i64: 1, 128>}, {pipeline_mode = #tpu.pipeline_mode<synchronous>, transform_indices = @transform_3, window_bounds = array<i64: 56, 169>}, {transform_indices = @transform_4, window_bounds = array<i64: 2, 128, 169>}]} {
    %c0 = arith.constant 0 : index
    %c0_0 = arith.constant 0 : index
    %0 = vector.load %arg2[%c0, %c0_0] : memref<112x1024xf32, #tpu.memory_space<vmem>>, vector<112x1024xf32>
    %c0_1 = arith.constant 0 : index
    %c0_2 = arith.constant 0 : index
    %1 = vector.load %arg3[%c0_1, %c0_2] : memref<1024x128xf32, #tpu.memory_space<vmem>>, vector<1024x128xf32>
    %cst = arith.constant dense<0.000000e+00> : vector<112x128xf32>
    %2 = tpu.matmul %0, %1, %cst {dimension_numbers = #tpu.dot_dimension_numbers<[1], [0], [0], [1], [0, 0, 1, 1], [], []>} : vector<112x1024xf32>, vector<1024x128xf32>, vector<112x128xf32> -> vector<112x128xf32>
    %c0_3 = arith.constant 0 : index
    %c0_4 = arith.constant 0 : index
    %3 = vector.load %arg4[%c0_3, %c0_4] : memref<1x128xf32, #tpu.memory_space<vmem>>, vector<1x128xf32>
    %4 = vector.broadcast %3 : vector<1x128xf32> to vector<112x128xf32>
    %5 = arith.addf %2, %4 : vector<112x128xf32>
    %c0_5 = arith.constant 0 : index
    %c0_6 = arith.constant 0 : index
    %6 = vector.load %arg5[%c0_5, %c0_6] : memref<56x169xf32, #tpu.memory_space<vmem>>, vector<56x169xf32>
    %7 = vector.extract_strided_slice %5 {offsets = [0, 0], sizes = [56, 128], strides = [1, 1]} : vector<112x128xf32> to vector<56x128xf32>
    %cst_7 = arith.constant dense<0.000000e+00> : vector<128x169xf32>
    %8 = tpu.matmul %7, %6, %cst_7 {dimension_numbers = #tpu.dot_dimension_numbers<[0], [0], [1], [1], [0, 1, 1, 1], [], []>} : vector<56x128xf32>, vector<56x169xf32>, vector<128x169xf32> -> vector<128x169xf32>
    %c0_8 = arith.constant 0 : index
    %c0_9 = arith.constant 0 : index
    %c0_10 = arith.constant 0 : index
    %9 = vector.load %arg6[%c0_8, %c0_9, %c0_10] : memref<2x128x169xf32, #tpu.memory_space<vmem>>, vector<1x128x169xf32>
    %10 = vector.shape_cast %9 : vector<1x128x169xf32> to vector<128x169xf32>
    %11 = vector.shape_cast %8 : vector<128x169xf32> to vector<1x128x169xf32>
    tpu.vector_store %arg6[%c0_8, %c0_9, %c0_10], %11 {strides = array<i32>} : memref<2x128x169xf32, #tpu.memory_space<vmem>>, vector<1x128x169xf32>,
    %12 = vector.extract_strided_slice %5 {offsets = [56, 0], sizes = [56, 128], strides = [1, 1]} : vector<112x128xf32> to vector<56x128xf32>
    %cst_11 = arith.constant dense<0.000000e+00> : vector<128x169xf32>
    %13 = tpu.matmul %12, %6, %cst_11 {dimension_numbers = #tpu.dot_dimension_numbers<[0], [0], [1], [1], [0, 1, 1, 1], [], []>} : vector<56x128xf32>, vector<56x169xf32>, vector<128x169xf32> -> vector<128x169xf32>
    %c1 = arith.constant 1 : index
    %c0_12 = arith.constant 0 : index
    %c0_13 = arith.constant 0 : index
    %14 = vector.load %arg6[%c1, %c0_12, %c0_13] : memref<2x128x169xf32, #tpu.memory_space<vmem>>, vector<1x128x169xf32>
    %15 = vector.shape_cast %14 : vector<1x128x169xf32> to vector<128x169xf32>
    %16 = vector.shape_cast %13 : vector<128x169xf32> to vector<1x128x169xf32>
    tpu.vector_store %arg6[%c1, %c0_12, %c0_13], %16 {strides = array<i32>} : memref<2x128x169xf32, #tpu.memory_space<vmem>>, vector<1x128x169xf32>,
    return
  }
  func.func @transform_0(%arg0: i32, %arg1: i32) -> (i32, i32) {
    %c0_i32 = arith.constant 0 : i32
    %c0_i32_0 = arith.constant 0 : i32
    return %arg1, %c0_i32 : i32, i32
  }
  func.func @transform_1(%arg0: i32, %arg1: i32) -> (i32, i32) {
    %c0_i32 = arith.constant 0 : i32
    %c0_i32_0 = arith.constant 0 : i32
    return %c0_i32, %arg0 : i32, i32
  }
  func.func @transform_2(%arg0: i32, %arg1: i32) -> (i32, i32) {
    %c0_i32 = arith.constant 0 : i32
    %c0_i32_0 = arith.constant 0 : i32
    return %c0_i32, %arg0 : i32, i32
  }
  func.func @transform_3(%arg0: i32, %arg1: i32) -> (i32, i32) {
    %c0_i32 = arith.constant 0 : i32
    %c0_i32_0 = arith.constant 0 : i32
    %c0_i32_1 = arith.constant 0 : i32
    return %c0_i32, %c0_i32_0 : i32, i32
  }
  func.func @transform_4(%arg0: i32, %arg1: i32) -> (i32, i32, i32) {
    %c0_i32 = arith.constant 0 : i32
    %c0_i32_0 = arith.constant 0 : i32
    return %arg1, %arg0, %c0_i32 : i32, i32, i32
  }
}

</mosaic_0001>

<llo_original>
// kernel: merge_feature_i3d.1
$region0: #{merge_feature_i3d.1}
  #allocation0 [shape = 'u32[]', space=smem, size = 0x4, offset = 0x4, fixed_abs, tag = 'smem constant byte address 0x4 - core index']
  #allocation1 [shape = 'u32[144,128]{1,0:T(1,128)}', space=vmem, size = 0x12000, scoped, tag = 'internal scratch']
  %s0 = inlined_call_operand.vmem [shape: f32[112,1024], index: 0, kind: input, shape index: {}]
  %s1 = inlined_call_operand.vmem [shape: f32[1024,256], index: 1, kind: input, shape index: {}]
  %s2 = inlined_call_operand.vmem [shape: f32[1,256], index: 2, kind: input, shape index: {}]
  %s3 = inlined_call_operand.vmem [shape: f32[56,169], index: 3, kind: input, shape index: {}]
  %s4 = inlined_call_operand.vmem [shape: f32[2,256,169], index: 4, kind: output, shape index: {}]
  %s5 = sld [smem:[#allocation0]]
  $region106: #{merge_feature_i3d.1} parent=0
    _
  %s7 = ssub.s32 1, %s5
  %s8 = scalar_select 0, %s7, %s5
  $region1: #{merge_feature_i3d.1} parent=0
    #allocation2 [shape = 'u8[1048576]{0}', space=vmem, size = 0x100000, scoped, tag = 'input window, operand 1']
    #allocation3 [shape = 'u8[524288]{0}', space=vmem, size = 0x80000, scoped, tag = 'output window, operand 0']
    loop: start=0, step=1, limit=4
    $region2: #{merge_feature_i3d.1} parent=1 // loop_pre_header
      _
    $region3: #{merge_feature_i3d.1} parent=1 // loop_header
      %s10 = sphi 0, %s14
      %p11 = scmp.ge.s32.totalorder %s10, 4
      %s17 = sphi 0, %s29
      %s18 = sphi 0, %s25
      %s19 = sphi 0, %s17
      %s20 = sphi 0, %s18
      %s21 = sphi 0, %s19
      %s22 = sphi 0, %s20
      %s32 = sphi 0, %s34
      %s35 = sphi 0, %s32
      %s36 = sphi 0, %s35
      %s52 = sphi 0, %s36
      %s58 = sphi 0, %s60
      %s61 = sphi 0, %s58
      %s62 = sphi 0, %s61
      %s78 = sphi 0, %s62
      %s84 = sphi 0, %s86
      %s87 = sphi 0, %s84
      %s88 = sphi 0, %s87
      %s104 = sphi 0, %s88
      %s108 = sphi 0, %s108
      %s110 = sphi 0, %s108
      %s111 = sphi 0, %s110
      %s125 = sphi 0, %s111
      %s133 = sphi 0, %s135
      %s136 = sphi 0, %s133
      %s137 = sphi 0, %s136
      %s153 = sphi 0, %s137
    $region4: #{merge_feature_i3d.1} parent=1 // loop_header_branch
      %13 = sbr.rel (%p11) target = $region8
    $region5: #{merge_feature_i3d.1} parent=1 // loop_body
      %s15 = ssub.s32 %s10, 1
      %s16 = ssub.s32 %s10, 2
      %s23 = sadd.s32 1, %s18
      %p24 = scmp.ge.s32.totalorder %s23, 1
      %s25 = scalar_select %p24, 0, %s23
      %s26 = sadd.s32 1, %s17
      %s27 = scalar_select %p24, %s26, %s17
      %p28 = scmp.ge.s32.totalorder %s27, 2
      %s29 = scalar_select %p28, 0, %s27
      %s30 = ssub.s32 %s18, %s25
      %p31 = scmp.eq.s32.totalorder %s30, 0
      %s33 = sadd.s32 %s32, 1
      %s34 = scalar_select %p31, %s32, %s33
      %p37 = pneg %p31
      %p38 = scmp.eq.s32.totalorder %s10, 1
      %p39 = por %p37, %p38
      %p40 = scmp.ne.s32.totalorder %s32, %s35
      %p41 = scmp.eq.s32.totalorder %s10, 0
      %p42 = por %p40, %p41
      %p43 = scmp.ne.s32.totalorder %s32, %s35
      %p44 = scmp.eq.s32.totalorder %s15, 1
      %p45 = por %p43, %p44
      %p46 = scmp.ne.s32.totalorder %s35, %s36
      %p47 = scmp.eq.s32.totalorder %s15, 0
      %p48 = por %p46, %p47
      %p49 = scmp.ne.s32.totalorder %s35, %s36
      %p50 = scmp.eq.s32.totalorder %s16, 1
      %p51 = por %p49, %p50
      %p53 = scmp.ne.s32.totalorder %s36, %s52
      %p54 = scmp.eq.s32.totalorder %s16, 0
      %p55 = por %p53, %p54
      %s56 = ssub.s32 %s17, %s29
      %p57 = scmp.eq.s32.totalorder %s56, 0
      %s59 = sadd.s32 %s58, 1
      %s60 = scalar_select %p57, %s58, %s59
      %p63 = pneg %p57
      %p64 = scmp.eq.s32.totalorder %s10, 1
      %p65 = por %p63, %p64
      %p66 = scmp.ne.s32.totalorder %s58, %s61
      %p67 = scmp.eq.s32.totalorder %s10, 0
      %p68 = por %p66, %p67
      %p69 = scmp.ne.s32.totalorder %s58, %s61
      %p70 = scmp.eq.s32.totalorder %s15, 1
      %p71 = por %p69, %p70
      %p72 = scmp.ne.s32.totalorder %s61, %s62
      %p73 = scmp.eq.s32.totalorder %s15, 0
      %p74 = por %p72, %p73
      %p75 = scmp.ne.s32.totalorder %s61, %s62
      %p76 = scmp.eq.s32.totalorder %s16, 1
      %p77 = por %p75, %p76
      %p79 = scmp.ne.s32.totalorder %s62, %s78
      %p80 = scmp.eq.s32.totalorder %s16, 0
      %p81 = por %p79, %p80
      %s82 = ssub.s32 %s17, %s29
      %p83 = scmp.eq.s32.totalorder %s82, 0
      %s85 = sadd.s32 %s84, 1
      %s86 = scalar_select %p83, %s84, %s85
      %p89 = pneg %p83
      %p90 = scmp.eq.s32.totalorder %s10, 1
      %p91 = por %p89, %p90
      %p92 = scmp.ne.s32.totalorder %s84, %s87
      %p93 = scmp.eq.s32.totalorder %s10, 0
      %p94 = por %p92, %p93
      %p95 = scmp.ne.s32.totalorder %s84, %s87
      %p96 = scmp.eq.s32.totalorder %s15, 1
      %p97 = por %p95, %p96
      %p98 = scmp.ne.s32.totalorder %s87, %s88
      %p99 = scmp.eq.s32.totalorder %s15, 0
      %p100 = por %p98, %p99
      %p101 = scmp.ne.s32.totalorder %s87, %s88
      %p102 = scmp.eq.s32.totalorder %s16, 1
      %p103 = por %p101, %p102
      %p105 = scmp.ne.s32.totalorder %s88, %s104
      %p106 = scmp.eq.s32.totalorder %s16, 0
      %p107 = por %p105, %p106
      %s109 = sadd.s32 %s108, 1
      %p112 = scmp.eq.s32.totalorder %s10, 1
      %p113 = scmp.ne.s32.totalorder %s108, %s110
      %p114 = scmp.eq.s32.totalorder %s10, 0
      %p115 = por %p113, %p114
      %p116 = scmp.ne.s32.totalorder %s108, %s110
      %p117 = scmp.eq.s32.totalorder %s15, 1
      %p118 = por %p116, %p117
      %p119 = scmp.ne.s32.totalorder %s110, %s111
      %p120 = scmp.eq.s32.totalorder %s15, 0
      %p121 = por %p119, %p120
      %p122 = scmp.ne.s32.totalorder %s110, %s111
      %p123 = scmp.eq.s32.totalorder %s16, 1
      %p124 = por %p122, %p123
      %p126 = scmp.ne.s32.totalorder %s111, %s125
      %p127 = scmp.eq.s32.totalorder %s16, 0
      %p128 = por %p126, %p127
      %s129 = ssub.s32 %s18, %s25
      %s130 = ssub.s32 %s17, %s29
      %s131 = sor.u32 %s129, %s130
      %p132 = scmp.eq.s32.totalorder %s131, 0
      %s134 = sadd.s32 %s133, 1
      %s135 = scalar_select %p132, %s133, %s134
      %p138 = pneg %p132
      %p139 = scmp.eq.s32.totalorder %s10, 1
      %p140 = por %p138, %p139
      %p141 = scmp.ne.s32.totalorder %s133, %s136
      %p142 = scmp.eq.s32.totalorder %s10, 0
      %p143 = por %p141, %p142
      %p144 = scmp.ne.s32.totalorder %s133, %s136
      %p145 = scmp.eq.s32.totalorder %s15, 1
      %p146 = por %p144, %p145
      %p147 = scmp.ne.s32.totalorder %s136, %s137
      %p148 = scmp.eq.s32.totalorder %s15, 0
      %p149 = por %p147, %p148
      %p150 = scmp.ne.s32.totalorder %s136, %s137
      %p151 = scmp.eq.s32.totalorder %s16, 1
      %p152 = por %p150, %p151
      %p154 = scmp.ne.s32.totalorder %s137, %s153
      %p155 = scmp.eq.s32.totalorder %s16, 0
      %p156 = por %p154, %p155
      %p157 = scmp.le.s32.totalorder 1, %s10
      %p158 = scmp.lt.s32.totalorder %s10, 3
      %p159 = pnand %p157, %p158
      %p160 = pneg %p159
      // Predicated region
      $region9: #{merge_feature_i3d.1} parent=5 // pred_check
        _
      $region10: #{merge_feature_i3d.1} parent=5 // pred_check_branch
        %162 = sbr.rel (%p159) target = $region12
      $region11: #{merge_feature_i3d.1} parent=5 // pred_region
        %s163 = ssub.s32 %s10, 1
        // Predicated region
        $region13: #{merge_feature_i3d.1} parent=11 // pred_check
          %p164 = pneg %p48
        $region14: #{merge_feature_i3d.1} parent=11 // pred_check_branch
          %166 = sbr.rel (%p164) target = $region16
        $region15: #{merge_feature_i3d.1} parent=11 // pred_region
          %s167 = smul.u32 14, %s20
          %p168 = scmp.lt.s32.totalorder %s167, 13
          %s169 = scalar_select %p168, %s167, 13
          %s170 = smul.addr %s169, 8
          %s171 = smul.addr %s170, 8
          %s172 = scalar_lea.vmem %s0, %s171
          %s173 = smul.u32 14, %s20
        $region16: #{merge_feature_i3d.1} parent=11 // pred_fallthru
          _
        // Predicated region
        $region17: #{merge_feature_i3d.1} parent=11 // pred_check
          %p174 = pneg %p121
        $region18: #{merge_feature_i3d.1} parent=11 // pred_check_branch
          %176 = sbr.rel (%p174) target = $region20
        $region19: #{merge_feature_i3d.1} parent=11 // pred_region
          _
        $region20: #{merge_feature_i3d.1} parent=11 // pred_fallthru
          _
      $region12: #{merge_feature_i3d.1} parent=5 // pred_fallthru
        _
      %p177 = scmp.lt.s32.totalorder %s10, 2
      // Predicated region
      $region21: #{merge_feature_i3d.1} parent=5 // pred_check
        %p178 = pneg %p177
      $region22: #{merge_feature_i3d.1} parent=5 // pred_check_branch
        %180 = sbr.rel (%p178) target = $region24
      $region23: #{merge_feature_i3d.1} parent=5 // pred_region
        // Predicated region
        $region25: #{merge_feature_i3d.1} parent=23 // pred_check
          %p181 = pneg %p68
        $region26: #{merge_feature_i3d.1} parent=23 // pred_check_branch
          %183 = sbr.rel (%p181) target = $region28
        $region27: #{merge_feature_i3d.1} parent=23 // pred_region
          %s184 = sand.u32 %s58, 1
          %s185 = sand.u32 %s58, 1
          %s186 = smul.addr %s185, 1024
          %s187 = scalar_lea.vmem [#allocation2], %s186
          %s188 = smul.addr %s17, 8
          %s189 = scalar_lea.vmem %s1, %s188
          // Predicated region
          $region29: #{merge_feature_i3d.1} parent=27 // pred_check
            _
          $region30: #{merge_feature_i3d.1} parent=27 // pred_check_branch
            %191 = sbr.rel (0) target = $region32
          $region31: #{merge_feature_i3d.1} parent=27 // pred_region
            // Predicated region
            $region33: #{merge_feature_i3d.1} parent=31 // pred_check
              _
            $region34: #{merge_feature_i3d.1} parent=31 // pred_check_branch
              %193 = sbr.rel (0) target = $region36
            $region35: #{merge_feature_i3d.1} parent=31 // pred_region
              // Predicated region
              $region48: #{merge_feature_i3d.1} parent=35 // pred_check
                _
              $region49: #{merge_feature_i3d.1} parent=35 // pred_check_branch
                %462 = sbr.rel (0) target = $region51
              $region50: #{merge_feature_i3d.1} parent=35 // pred_region
                loop: start=0, step=1, limit=1
                $region52: #{merge_feature_i3d.1} parent=50 // loop_pre_header
                  _
                $region53: #{merge_feature_i3d.1} parent=50 // loop_header
                  %s464 = sphi 0, %s468
                  %p465 = scmp.ge.s32.totalorder %s464, 1
                  %s469 = sphi %s189, %s189
                  %s470 = sphi %s187, %s187
                $region54: #{merge_feature_i3d.1} parent=50 // loop_header_branch
                  %467 = sbr.rel (%p465) target = $region58
                $region55: #{merge_feature_i3d.1} parent=50 // loop_body
                  %v471 = vld [vmem:[%s469] sm:$0xff]
                  %472 = vst [vmem:[%s470] sm:$0xff] %v471
                  %v473 = vld [vmem:[%s469 + $0x10] sm:$0xff]
                  %474 = vst [vmem:[%s470 + $0x8] sm:$0xff] %v473
                  %v475 = vld [vmem:[%s469 + $0x20] sm:$0xff]
                  %476 = vst [vmem:[%s470 + $0x10] sm:$0xff] %v475
                  %v477 = vld [vmem:[%s469 + $0x30] sm:$0xff]
                  %478 = vst [vmem:[%s470 + $0x18] sm:$0xff] %v477
                  %v479 = vld [vmem:[%s469 + $0x40] sm:$0xff]
                  %480 = vst [vmem:[%s470 + $0x20] sm:$0xff] %v479
                  %v481 = vld [vmem:[%s469 + $0x50] sm:$0xff]
                  %482 = vst [vmem:[%s470 + $0x28] sm:$0xff] %v481
                  %v483 = vld [vmem:[%s469 + $0x60] sm:$0xff]
                  %484 = vst [vmem:[%s470 + $0x30] sm:$0xff] %v483
                  %v485 = vld [vmem:[%s469 + $0x70] sm:$0xff]
                  %486 = vst [vmem:[%s470 + $0x38] sm:$0xff] %v485
                  %v487 = vld [vmem:[%s469 + $0x80] sm:$0xff]
                  %488 = vst [vmem:[%s470 + $0x40] sm:$0xff] %v487
                  %v489 = vld [vmem:[%s469 + $0x90] sm:$0xff]
                  %490 = vst [vmem:[%s470 + $0x48] sm:$0xff] %v489
                  %v491 = vld [vmem:[%s469 + $0xa0] sm:$0xff]
                  %492 = vst [vmem:[%s470 + $0x50] sm:$0xff] %v491
                  %v493 = vld [vmem:[%s469 + $0xb0] sm:$0xff]
                  %494 = vst [vmem:[%s470 + $0x58] sm:$0xff] %v493
                  %v495 = vld [vmem:[%s469 + $0xc0] sm:$0xff]
                  %496 = vst [vmem:[%s470 + $0x60] sm:$0xff] %v495
                  %v497 = vld [vmem:[%s469 + $0xd0] sm:$0xff]
                  %498 = vst [vmem:[%s470 + $0x68] sm:$0xff] %v497
                  %v499 = vld [vmem:[%s469 + $0xe0] sm:$0xff]
                  %500 = vst [vmem:[%s470 + $0x70] sm:$0xff] %v499
                  %v501 = vld [vmem:[%s469 + $0xf0] sm:$0xff]
                  %502 = vst [vmem:[%s470 + $0x78] sm:$0xff] %v501
                  %v503 = vld [vmem:[%s469 + $0x100] sm:$0xff]
                  %504 = vst [vmem:[%s470 + $0x80] sm:$0xff] %v503
                  %v505 = vld [vmem:[%s469 + $0x110] sm:$0xff]
                  %506 = vst [vmem:[%s470 + $0x88] sm:$0xff] %v505
                  %v507 = vld [vmem:[%s469 + $0x120] sm:$0xff]
                  %508 = vst [vmem:[%s470 + $0x90] sm:$0xff] %v507
                  %v509 = vld [vmem:[%s469 + $0x130] sm:$0xff]
                  %510 = vst [vmem:[%s470 + $0x98] sm:$0xff] %v509
                  %v511 = vld [vmem:[%s469 + $0x140] sm:$0xff]
                  %512 = vst [vmem:[%s470 + $0xa0] sm:$0xff] %v511
                  %v513 = vld [vmem:[%s469 + $0x150] sm:$0xff]
                  %514 = vst [vmem:[%s470 + $0xa8] sm:$0xff] %v513
                  %v515 = vld [vmem:[%s469 + $0x160] sm:$0xff]
                  %516 = vst [vmem:[%s470 + $0xb0] sm:$0xff] %v515
                  %v517 = vld [vmem:[%s469 + $0x170] sm:$0xff]
                  %518 = vst [vmem:[%s470 + $0xb8] sm:$0xff] %v517
                  %v519 = vld [vmem:[%s469 + $0x180] sm:$0xff]
                  %520 = vst [vmem:[%s470 + $0xc0] sm:$0xff] %v519
                  %v521 = vld [vmem:[%s469 + $0x190] sm:$0xff]
                  %522 = vst [vmem:[%s470 + $0xc8] sm:$0xff] %v521
                  %v523 = vld [vmem:[%s469 + $0x1a0] sm:$0xff]
                  %524 = vst [vmem:[%s470 + $0xd0] sm:$0xff] %v523
                  %v525 = vld [vmem:[%s469 + $0x1b0] sm:$0xff]
                  %526 = vst [vmem:[%s470 + $0xd8] sm:$0xff] %v525
                  %v527 = vld [vmem:[%s469 + $0x1c0] sm:$0xff]
                  %528 = vst [vmem:[%s470 + $0xe0] sm:$0xff] %v527
                  %v529 = vld [vmem:[%s469 + $0x1d0] sm:$0xff]
                  %530 = vst [vmem:[%s470 + $0xe8] sm:$0xff] %v529
                  %v531 = vld [vmem:[%s469 + $0x1e0] sm:$0xff]
                  %532 = vst [vmem:[%s470 + $0xf0] sm:$0xff] %v531
                  %v533 = vld [vmem:[%s469 + $0x1f0] sm:$0xff]
                  %534 = vst [vmem:[%s470 + $0xf8] sm:$0xff] %v533
                  %v535 = vld [vmem:[%s469 + $0x200] sm:$0xff]
                  %536 = vst [vmem:[%s470 + $0x100] sm:$0xff] %v535
                  %v537 = vld [vmem:[%s469 + $0x210] sm:$0xff]
                  %538 = vst [vmem:[%s470 + $0x108] sm:$0xff] %v537
                  %v539 = vld [vmem:[%s469 + $0x220] sm:$0xff]
                  %540 = vst [vmem:[%s470 + $0x110] sm:$0xff] %v539
                  %v541 = vld [vmem:[%s469 + $0x230] sm:$0xff]
                  %542 = vst [vmem:[%s470 + $0x118] sm:$0xff] %v541
                  %v543 = vld [vmem:[%s469 + $0x240] sm:$0xff]
                  %544 = vst [vmem:[%s470 + $0x120] sm:$0xff] %v543
                  %v545 = vld [vmem:[%s469 + $0x250] sm:$0xff]
                  %546 = vst [vmem:[%s470 + $0x128] sm:$0xff] %v545
                  %v547 = vld [vmem:[%s469 + $0x260] sm:$0xff]
                  %548 = vst [vmem:[%s470 + $0x130] sm:$0xff] %v547
                  %v549 = vld [vmem:[%s469 + $0x270] sm:$0xff]
                  %550 = vst [vmem:[%s470 + $0x138] sm:$0xff] %v549
                  %v551 = vld [vmem:[%s469 + $0x280] sm:$0xff]
                  %552 = vst [vmem:[%s470 + $0x140] sm:$0xff] %v551
                  %v553 = vld [vmem:[%s469 + $0x290] sm:$0xff]
                  %554 = vst [vmem:[%s470 + $0x148] sm:$0xff] %v553
                  %v555 = vld [vmem:[%s469 + $0x2a0] sm:$0xff]
                  %556 = vst [vmem:[%s470 + $0x150] sm:$0xff] %v555
                  %v557 = vld [vmem:[%s469 + $0x2b0] sm:$0xff]
                  %558 = vst [vmem:[%s470 + $0x158] sm:$0xff] %v557
                  %v559 = vld [vmem:[%s469 + $0x2c0] sm:$0xff]
                  %560 = vst [vmem:[%s470 + $0x160] sm:$0xff] %v559
                  %v561 = vld [vmem:[%s469 + $0x2d0] sm:$0xff]
                  %562 = vst [vmem:[%s470 + $0x168] sm:$0xff] %v561
                  %v563 = vld [vmem:[%s469 + $0x2e0] sm:$0xff]
                  %564 = vst [vmem:[%s470 + $0x170] sm:$0xff] %v563
                  %v565 = vld [vmem:[%s469 + $0x2f0] sm:$0xff]
                  %566 = vst [vmem:[%s470 + $0x178] sm:$0xff] %v565
                  %v567 = vld [vmem:[%s469 + $0x300] sm:$0xff]
                  %568 = vst [vmem:[%s470 + $0x180] sm:$0xff] %v567
                  %v569 = vld [vmem:[%s469 + $0x310] sm:$0xff]
                  %570 = vst [vmem:[%s470 + $0x188] sm:$0xff] %v569
                  %v571 = vld [vmem:[%s469 + $0x320] sm:$0xff]
                  %572 = vst [vmem:[%s470 + $0x190] sm:$0xff] %v571
                  %v573 = vld [vmem:[%s469 + $0x330] sm:$0xff]
                  %574 = vst [vmem:[%s470 + $0x198] sm:$0xff] %v573
                  %v575 = vld [vmem:[%s469 + $0x340] sm:$0xff]
                  %576 = vst [vmem:[%s470 + $0x1a0] sm:$0xff] %v575
                  %v577 = vld [vmem:[%s469 + $0x350] sm:$0xff]
                  %578 = vst [vmem:[%s470 + $0x1a8] sm:$0xff] %v577
                  %v579 = vld [vmem:[%s469 + $0x360] sm:$0xff]
                  %580 = vst [vmem:[%s470 + $0x1b0] sm:$0xff] %v579
                  %v581 = vld [vmem:[%s469 + $0x370] sm:$0xff]
                  %582 = vst [vmem:[%s470 + $0x1b8] sm:$0xff] %v581
                  %v583 = vld [vmem:[%s469 + $0x380] sm:$0xff]
                  %584 = vst [vmem:[%s470 + $0x1c0] sm:$0xff] %v583
                  %v585 = vld [vmem:[%s469 + $0x390] sm:$0xff]
                  %586 = vst [vmem:[%s470 + $0x1c8] sm:$0xff] %v585
                  %v587 = vld [vmem:[%s469 + $0x3a0] sm:$0xff]
                  %588 = vst [vmem:[%s470 + $0x1d0] sm:$0xff] %v587
                  %v589 = vld [vmem:[%s469 + $0x3b0] sm:$0xff]
                  %590 = vst [vmem:[%s470 + $0x1d8] sm:$0xff] %v589
                  %v591 = vld [vmem:[%s469 + $0x3c0] sm:$0xff]
                  %592 = vst [vmem:[%s470 + $0x1e0] sm:$0xff] %v591
                  %v593 = vld [vmem:[%s469 + $0x3d0] sm:$0xff]
                  %594 = vst [vmem:[%s470 + $0x1e8] sm:$0xff] %v593
                  %v595 = vld [vmem:[%s469 + $0x3e0] sm:$0xff]
                  %596 = vst [vmem:[%s470 + $0x1f0] sm:$0xff] %v595
                  %v597 = vld [vmem:[%s469 + $0x3f0] sm:$0xff]
                  %598 = vst [vmem:[%s470 + $0x1f8] sm:$0xff] %v597
                  %v599 = vld [vmem:[%s469 + $0x400] sm:$0xff]
                  %600 = vst [vmem:[%s470 + $0x200] sm:$0xff] %v599
                  %v601 = vld [vmem:[%s469 + $0x410] sm:$0xff]
                  %602 = vst [vmem:[%s470 + $0x208] sm:$0xff] %v601
                  %v603 = vld [vmem:[%s469 + $0x420] sm:$0xff]
                  %604 = vst [vmem:[%s470 + $0x210] sm:$0xff] %v603
                  %v605 = vld [vmem:[%s469 + $0x430] sm:$0xff]
                  %606 = vst [vmem:[%s470 + $0x218] sm:$0xff] %v605
                  %v607 = vld [vmem:[%s469 + $0x440] sm:$0xff]
                  %608 = vst [vmem:[%s470 + $0x220] sm:$0xff] %v607
                  %v609 = vld [vmem:[%s469 + $0x450] sm:$0xff]
                  %610 = vst [vmem:[%s470 + $0x228] sm:$0xff] %v609
                  %v611 = vld [vmem:[%s469 + $0x460] sm:$0xff]
                  %612 = vst [vmem:[%s470 + $0x230] sm:$0xff] %v611
                  %v613 = vld [vmem:[%s469 + $0x470] sm:$0xff]
                  %614 = vst [vmem:[%s470 + $0x238] sm:$0xff] %v613
                  %v615 = vld [vmem:[%s469 + $0x480] sm:$0xff]
                  %616 = vst [vmem:[%s470 + $0x240] sm:$0xff] %v615
                  %v617 = vld [vmem:[%s469 + $0x490] sm:$0xff]
                  %618 = vst [vmem:[%s470 + $0x248] sm:$0xff] %v617
                  %v619 = vld [vmem:[%s469 + $0x4a0] sm:$0xff]
                  %620 = vst [vmem:[%s470 + $0x250] sm:$0xff] %v619
                  %v621 = vld [vmem:[%s469 + $0x4b0] sm:$0xff]
                  %622 = vst [vmem:[%s470 + $0x258] sm:$0xff] %v621
                  %v623 = vld [vmem:[%s469 + $0x4c0] sm:$0xff]
                  %624 = vst [vmem:[%s470 + $0x260] sm:$0xff] %v623
                  %v625 = vld [vmem:[%s469 + $0x4d0] sm:$0xff]
                  %626 = vst [vmem:[%s470 + $0x268] sm:$0xff] %v625
                  %v627 = vld [vmem:[%s469 + $0x4e0] sm:$0xff]
                  %628 = vst [vmem:[%s470 + $0x270] sm:$0xff] %v627
                  %v629 = vld [vmem:[%s469 + $0x4f0] sm:$0xff]
                  %630 = vst [vmem:[%s470 + $0x278] sm:$0xff] %v629
                  %v631 = vld [vmem:[%s469 + $0x500] sm:$0xff]
                  %632 = vst [vmem:[%s470 + $0x280] sm:$0xff] %v631
                  %v633 = vld [vmem:[%s469 + $0x510] sm:$0xff]
                  %634 = vst [vmem:[%s470 + $0x288] sm:$0xff] %v633
                  %v635 = vld [vmem:[%s469 + $0x520] sm:$0xff]
                  %636 = vst [vmem:[%s470 + $0x290] sm:$0xff] %v635
                  %v637 = vld [vmem:[%s469 + $0x530] sm:$0xff]
                  %638 = vst [vmem:[%s470 + $0x298] sm:$0xff] %v637
                  %v639 = vld [vmem:[%s469 + $0x540] sm:$0xff]
                  %640 = vst [vmem:[%s470 + $0x2a0] sm:$0xff] %v639
                  %v641 = vld [vmem:[%s469 + $0x550] sm:$0xff]
                  %642 = vst [vmem:[%s470 + $0x2a8] sm:$0xff] %v641
                  %v643 = vld [vmem:[%s469 + $0x560] sm:$0xff]
                  %644 = vst [vmem:[%s470 + $0x2b0] sm:$0xff] %v643
                  %v645 = vld [vmem:[%s469 + $0x570] sm:$0xff]
                  %646 = vst [vmem:[%s470 + $0x2b8] sm:$0xff] %v645
                  %v647 = vld [vmem:[%s469 + $0x580] sm:$0xff]
                  %648 = vst [vmem:[%s470 + $0x2c0] sm:$0xff] %v647
                  %v649 = vld [vmem:[%s469 + $0x590] sm:$0xff]
                  %650 = vst [vmem:[%s470 + $0x2c8] sm:$0xff] %v649
                  %v651 = vld [vmem:[%s469 + $0x5a0] sm:$0xff]
                  %652 = vst [vmem:[%s470 + $0x2d0] sm:$0xff] %v651
                  %v653 = vld [vmem:[%s469 + $0x5b0] sm:$0xff]
                  %654 = vst [vmem:[%s470 + $0x2d8] sm:$0xff] %v653
                  %v655 = vld [vmem:[%s469 + $0x5c0] sm:$0xff]
                  %656 = vst [vmem:[%s470 + $0x2e0] sm:$0xff] %v655
                  %v657 = vld [vmem:[%s469 + $0x5d0] sm:$0xff]
                  %658 = vst [vmem:[%s470 + $0x2e8] sm:$0xff] %v657
                  %v659 = vld [vmem:[%s469 + $0x5e0] sm:$0xff]
                  %660 = vst [vmem:[%s470 + $0x2f0] sm:$0xff] %v659
                  %v661 = vld [vmem:[%s469 + $0x5f0] sm:$0xff]
                  %662 = vst [vmem:[%s470 + $0x2f8] sm:$0xff] %v661
                  %v663 = vld [vmem:[%s469 + $0x600] sm:$0xff]
                  %664 = vst [vmem:[%s470 + $0x300] sm:$0xff] %v663
                  %v665 = vld [vmem:[%s469 + $0x610] sm:$0xff]
                  %666 = vst [vmem:[%s470 + $0x308] sm:$0xff] %v665
                  %v667 = vld [vmem:[%s469 + $0x620] sm:$0xff]
                  %668 = vst [vmem:[%s470 + $0x310] sm:$0xff] %v667
                  %v669 = vld [vmem:[%s469 + $0x630] sm:$0xff]
                  %670 = vst [vmem:[%s470 + $0x318] sm:$0xff] %v669
                  %v671 = vld [vmem:[%s469 + $0x640] sm:$0xff]
                  %672 = vst [vmem:[%s470 + $0x320] sm:$0xff] %v671
                  %v673 = vld [vmem:[%s469 + $0x650] sm:$0xff]
                  %674 = vst [vmem:[%s470 + $0x328] sm:$0xff] %v673
                  %v675 = vld [vmem:[%s469 + $0x660] sm:$0xff]
                  %676 = vst [vmem:[%s470 + $0x330] sm:$0xff] %v675
                  %v677 = vld [vmem:[%s469 + $0x670] sm:$0xff]
                  %678 = vst [vmem:[%s470 + $0x338] sm:$0xff] %v677
                  %v679 = vld [vmem:[%s469 + $0x680] sm:$0xff]
                  %680 = vst [vmem:[%s470 + $0x340] sm:$0xff] %v679
                  %v681 = vld [vmem:[%s469 + $0x690] sm:$0xff]
                  %682 = vst [vmem:[%s470 + $0x348] sm:$0xff] %v681
                  %v683 = vld [vmem:[%s469 + $0x6a0] sm:$0xff]
                  %684 = vst [vmem:[%s470 + $0x350] sm:$0xff] %v683
                  %v685 = vld [vmem:[%s469 + $0x6b0] sm:$0xff]
                  %686 = vst [vmem:[%s470 + $0x358] sm:$0xff] %v685
                  %v687 = vld [vmem:[%s469 + $0x6c0] sm:$0xff]
                  %688 = vst [vmem:[%s470 + $0x360] sm:$0xff] %v687
                  %v689 = vld [vmem:[%s469 + $0x6d0] sm:$0xff]
                  %690 = vst [vmem:[%s470 + $0x368] sm:$0xff] %v689
                  %v691 = vld [vmem:[%s469 + $0x6e0] sm:$0xff]
                  %692 = vst [vmem:[%s470 + $0x370] sm:$0xff] %v691
                  %v693 = vld [vmem:[%s469 + $0x6f0] sm:$0xff]
                  %694 = vst [vmem:[%s470 + $0x378] sm:$0xff] %v693
                  %v695 = vld [vmem:[%s469 + $0x700] sm:$0xff]
                  %696 = vst [vmem:[%s470 + $0x380] sm:$0xff] %v695
                  %v697 = vld [vmem:[%s469 + $0x710] sm:$0xff]
                  %698 = vst [vmem:[%s470 + $0x388] sm:$0xff] %v697
                  %v699 = vld [vmem:[%s469 + $0x720] sm:$0xff]
                  %700 = vst [vmem:[%s470 + $0x390] sm:$0xff] %v699
                  %v701 = vld [vmem:[%s469 + $0x730] sm:$0xff]
                  %702 = vst [vmem:[%s470 + $0x398] sm:$0xff] %v701
                  %v703 = vld [vmem:[%s469 + $0x740] sm:$0xff]
                  %704 = vst [vmem:[%s470 + $0x3a0] sm:$0xff] %v703
                  %v705 = vld [vmem:[%s469 + $0x750] sm:$0xff]
                  %706 = vst [vmem:[%s470 + $0x3a8] sm:$0xff] %v705
                  %v707 = vld [vmem:[%s469 + $0x760] sm:$0xff]
                  %708 = vst [vmem:[%s470 + $0x3b0] sm:$0xff] %v707
                  %v709 = vld [vmem:[%s469 + $0x770] sm:$0xff]
                  %710 = vst [vmem:[%s470 + $0x3b8] sm:$0xff] %v709
                  %v711 = vld [vmem:[%s469 + $0x780] sm:$0xff]
                  %712 = vst [vmem:[%s470 + $0x3c0] sm:$0xff] %v711
                  %v713 = vld [vmem:[%s469 + $0x790] sm:$0xff]
                  %714 = vst [vmem:[%s470 + $0x3c8] sm:$0xff] %v713
                  %v715 = vld [vmem:[%s469 + $0x7a0] sm:$0xff]
                  %716 = vst [vmem:[%s470 + $0x3d0] sm:$0xff] %v715
                  %v717 = vld [vmem:[%s469 + $0x7b0] sm:$0xff]
                  %718 = vst [vmem:[%s470 + $0x3d8] sm:$0xff] %v717
                  %v719 = vld [vmem:[%s469 + $0x7c0] sm:$0xff]
                  %720 = vst [vmem:[%s470 + $0x3e0] sm:$0xff] %v719
                  %v721 = vld [vmem:[%s469 + $0x7d0] sm:$0xff]
                  %722 = vst [vmem:[%s470 + $0x3e8] sm:$0xff] %v721
                  %v723 = vld [vmem:[%s469 + $0x7e0] sm:$0xff]
                  %724 = vst [vmem:[%s470 + $0x3f0] sm:$0xff] %v723
                  %v725 = vld [vmem:[%s469 + $0x7f0] sm:$0xff]
                  %726 = vst [vmem:[%s470 + $0x3f8] sm:$0xff] %v725
                $region56: #{merge_feature_i3d.1} parent=50 // loop_footer
                  %s468 = sadd.s32 1, %s464
                $region57: #{merge_feature_i3d.1} parent=50 // loop_footer_branch
                  %463 = sbr.rel target = $region53
                $region58: #{merge_feature_i3d.1} parent=50 // loop_exit
                  _
              $region51: #{merge_feature_i3d.1} parent=35 // pred_fallthru
                _
              // Predicated region
              $region59: #{merge_feature_i3d.1} parent=35 // pred_check
                _
              $region60: #{merge_feature_i3d.1} parent=35 // pred_check_branch
                %728 = sbr.rel target = $region62
              $region61: #{merge_feature_i3d.1} parent=35 // pred_region
                _
              $region62: #{merge_feature_i3d.1} parent=35 // pred_fallthru
                _
            $region36: #{merge_feature_i3d.1} parent=31 // pred_fallthru
              _
            // Predicated region
            $region37: #{merge_feature_i3d.1} parent=31 // pred_check
              _
            $region38: #{merge_feature_i3d.1} parent=31 // pred_check_branch
              %195 = sbr.rel target = $region40
            $region39: #{merge_feature_i3d.1} parent=31 // pred_region
              loop: start=0, step=1, limit=1
              $region41: #{merge_feature_i3d.1} parent=39 // loop_pre_header
                _
              $region42: #{merge_feature_i3d.1} parent=39 // loop_header
                %s198 = sphi 0, %s202
                %p199 = scmp.ge.s32.totalorder %s198, 1
                %s203 = sphi %s189, %s189
                %s204 = sphi %s187, %s187
              $region43: #{merge_feature_i3d.1} parent=39 // loop_header_branch
                %201 = sbr.rel (%p199) target = $region47
              $region44: #{merge_feature_i3d.1} parent=39 // loop_body
                %v205 = vld [vmem:[%s203] sm:$0xff]
                %206 = vst [vmem:[%s204] sm:$0xff] %v205
                %v207 = vld [vmem:[%s203 + $0x10] sm:$0xff]
                %208 = vst [vmem:[%s204 + $0x8] sm:$0xff] %v207
                %v209 = vld [vmem:[%s203 + $0x20] sm:$0xff]
                %210 = vst [vmem:[%s204 + $0x10] sm:$0xff] %v209
                %v211 = vld [vmem:[%s203 + $0x30] sm:$0xff]
                %212 = vst [vmem:[%s204 + $0x18] sm:$0xff] %v211
                %v213 = vld [vmem:[%s203 + $0x40] sm:$0xff]
                %214 = vst [vmem:[%s204 + $0x20] sm:$0xff] %v213
                %v215 = vld [vmem:[%s203 + $0x50] sm:$0xff]
                %216 = vst [vmem:[%s204 + $0x28] sm:$0xff] %v215
                %v217 = vld [vmem:[%s203 + $0x60] sm:$0xff]
                %218 = vst [vmem:[%s204 + $0x30] sm:$0xff] %v217
                %v219 = vld [vmem:[%s203 + $0x70] sm:$0xff]
                %220 = vst [vmem:[%s204 + $0x38] sm:$0xff] %v219
                %v221 = vld [vmem:[%s203 + $0x80] sm:$0xff]
                %222 = vst [vmem:[%s204 + $0x40] sm:$0xff] %v221
                %v223 = vld [vmem:[%s203 + $0x90] sm:$0xff]
                %224 = vst [vmem:[%s204 + $0x48] sm:$0xff] %v223
                %v225 = vld [vmem:[%s203 + $0xa0] sm:$0xff]
                %226 = vst [vmem:[%s204 + $0x50] sm:$0xff] %v225
                %v227 = vld [vmem:[%s203 + $0xb0] sm:$0xff]
                %228 = vst [vmem:[%s204 + $0x58] sm:$0xff] %v227
                %v229 = vld [vmem:[%s203 + $0xc0] sm:$0xff]
                %230 = vst [vmem:[%s204 + $0x60] sm:$0xff] %v229
                %v231 = vld [vmem:[%s203 + $0xd0] sm:$0xff]
                %232 = vst [vmem:[%s204 + $0x68] sm:$0xff] %v231
                %v233 = vld [vmem:[%s203 + $0xe0] sm:$0xff]
                %234 = vst [vmem:[%s204 + $0x70] sm:$0xff] %v233
                %v235 = vld [vmem:[%s203 + $0xf0] sm:$0xff]
                %236 = vst [vmem:[%s204 + $0x78] sm:$0xff] %v235
                %v237 = vld [vmem:[%s203 + $0x100] sm:$0xff]
                %238 = vst [vmem:[%s204 + $0x80] sm:$0xff] %v237
                %v239 = vld [vmem:[%s203 + $0x110] sm:$0xff]
                %240 = vst [vmem:[%s204 + $0x88] sm:$0xff] %v239
                %v241 = vld [vmem:[%s203 + $0x120] sm:$0xff]
                %242 = vst [vmem:[%s204 + $0x90] sm:$0xff] %v241
                %v243 = vld [vmem:[%s203 + $0x130] sm:$0xff]
                %244 = vst [vmem:[%s204 + $0x98] sm:$0xff] %v243
                %v245 = vld [vmem:[%s203 + $0x140] sm:$0xff]
                %246 = vst [vmem:[%s204 + $0xa0] sm:$0xff] %v245
                %v247 = vld [vmem:[%s203 + $0x150] sm:$0xff]
                %248 = vst [vmem:[%s204 + $0xa8] sm:$0xff] %v247
                %v249 = vld [vmem:[%s203 + $0x160] sm:$0xff]
                %250 = vst [vmem:[%s204 + $0xb0] sm:$0xff] %v249
                %v251 = vld [vmem:[%s203 + $0x170] sm:$0xff]
                %252 = vst [vmem:[%s204 + $0xb8] sm:$0xff] %v251
                %v253 = vld [vmem:[%s203 + $0x180] sm:$0xff]
                %254 = vst [vmem:[%s204 + $0xc0] sm:$0xff] %v253
                %v255 = vld [vmem:[%s203 + $0x190] sm:$0xff]
                %256 = vst [vmem:[%s204 + $0xc8] sm:$0xff] %v255
                %v257 = vld [vmem:[%s203 + $0x1a0] sm:$0xff]
                %258 = vst [vmem:[%s204 + $0xd0] sm:$0xff] %v257
                %v259 = vld [vmem:[%s203 + $0x1b0] sm:$0xff]
                %260 = vst [vmem:[%s204 + $0xd8] sm:$0xff] %v259
                %v261 = vld [vmem:[%s203 + $0x1c0] sm:$0xff]
                %262 = vst [vmem:[%s204 + $0xe0] sm:$0xff] %v261
                %v263 = vld [vmem:[%s203 + $0x1d0] sm:$0xff]
                %264 = vst [vmem:[%s204 + $0xe8] sm:$0xff] %v263
                %v265 = vld [vmem:[%s203 + $0x1e0] sm:$0xff]
                %266 = vst [vmem:[%s204 + $0xf0] sm:$0xff] %v265
                %v267 = vld [vmem:[%s203 + $0x1f0] sm:$0xff]
                %268 = vst [vmem:[%s204 + $0xf8] sm:$0xff] %v267
                %v269 = vld [vmem:[%s203 + $0x200] sm:$0xff]
                %270 = vst [vmem:[%s204 + $0x100] sm:$0xff] %v269
                %v271 = vld [vmem:[%s203 + $0x210] sm:$0xff]
                %272 = vst [vmem:[%s204 + $0x108] sm:$0xff] %v271
                %v273 = vld [vmem:[%s203 + $0x220] sm:$0xff]
                %274 = vst [vmem:[%s204 + $0x110] sm:$0xff] %v273
                %v275 = vld [vmem:[%s203 + $0x230] sm:$0xff]
                %276 = vst [vmem:[%s204 + $0x118] sm:$0xff] %v275
                %v277 = vld [vmem:[%s203 + $0x240] sm:$0xff]
                %278 = vst [vmem:[%s204 + $0x120] sm:$0xff] %v277
                %v279 = vld [vmem:[%s203 + $0x250] sm:$0xff]
                %280 = vst [vmem:[%s204 + $0x128] sm:$0xff] %v279
                %v281 = vld [vmem:[%s203 + $0x260] sm:$0xff]
                %282 = vst [vmem:[%s204 + $0x130] sm:$0xff] %v281
                %v283 = vld [vmem:[%s203 + $0x270] sm:$0xff]
                %284 = vst [vmem:[%s204 + $0x138] sm:$0xff] %v283
                %v285 = vld [vmem:[%s203 + $0x280] sm:$0xff]
                %286 = vst [vmem:[%s204 + $0x140] sm:$0xff] %v285
                %v287 = vld [vmem:[%s203 + $0x290] sm:$0xff]
                %288 = vst [vmem:[%s204 + $0x148] sm:$0xff] %v287
                %v289 = vld [vmem:[%s203 + $0x2a0] sm:$0xff]
                %290 = vst [vmem:[%s204 + $0x150] sm:$0xff] %v289
                %v291 = vld [vmem:[%s203 + $0x2b0] sm:$0xff]
                %292 = vst [vmem:[%s204 + $0x158] sm:$0xff] %v291
                %v293 = vld [vmem:[%s203 + $0x2c0] sm:$0xff]
                %294 = vst [vmem:[%s204 + $0x160] sm:$0xff] %v293
                %v295 = vld [vmem:[%s203 + $0x2d0] sm:$0xff]
                %296 = vst [vmem:[%s204 + $0x168] sm:$0xff] %v295
                %v297 = vld [vmem:[%s203 + $0x2e0] sm:$0xff]
                %298 = vst [vmem:[%s204 + $0x170] sm:$0xff] %v297
                %v299 = vld [vmem:[%s203 + $0x2f0] sm:$0xff]
                %300 = vst [vmem:[%s204 + $0x178] sm:$0xff] %v299
                %v301 = vld [vmem:[%s203 + $0x300] sm:$0xff]
                %302 = vst [vmem:[%s204 + $0x180] sm:$0xff] %v301
                %v303 = vld [vmem:[%s203 + $0x310] sm:$0xff]
                %304 = vst [vmem:[%s204 + $0x188] sm:$0xff] %v303
                %v305 = vld [vmem:[%s203 + $0x320] sm:$0xff]
                %306 = vst [vmem:[%s204 + $0x190] sm:$0xff] %v305
                %v307 = vld [vmem:[%s203 + $0x330] sm:$0xff]
                %308 = vst [vmem:[%s204 + $0x198] sm:$0xff] %v307
                %v309 = vld [vmem:[%s203 + $0x340] sm:$0xff]
                %310 = vst [vmem:[%s204 + $0x1a0] sm:$0xff] %v309
                %v311 = vld [vmem:[%s203 + $0x350] sm:$0xff]
                %312 = vst [vmem:[%s204 + $0x1a8] sm:$0xff] %v311
                %v313 = vld [vmem:[%s203 + $0x360] sm:$0xff]
                %314 = vst [vmem:[%s204 + $0x1b0] sm:$0xff] %v313
                %v315 = vld [vmem:[%s203 + $0x370] sm:$0xff]
                %316 = vst [vmem:[%s204 + $0x1b8] sm:$0xff] %v315
                %v317 = vld [vmem:[%s203 + $0x380] sm:$0xff]
                %318 = vst [vmem:[%s204 + $0x1c0] sm:$0xff] %v317
                %v319 = vld [vmem:[%s203 + $0x390] sm:$0xff]
                %320 = vst [vmem:[%s204 + $0x1c8] sm:$0xff] %v319
                %v321 = vld [vmem:[%s203 + $0x3a0] sm:$0xff]
                %322 = vst [vmem:[%s204 + $0x1d0] sm:$0xff] %v321
                %v323 = vld [vmem:[%s203 + $0x3b0] sm:$0xff]
                %324 = vst [vmem:[%s204 + $0x1d8] sm:$0xff] %v323
                %v325 = vld [vmem:[%s203 + $0x3c0] sm:$0xff]
                %326 = vst [vmem:[%s204 + $0x1e0] sm:$0xff] %v325
                %v327 = vld [vmem:[%s203 + $0x3d0] sm:$0xff]
                %328 = vst [vmem:[%s204 + $0x1e8] sm:$0xff] %v327
                %v329 = vld [vmem:[%s203 + $0x3e0] sm:$0xff]
                %330 = vst [vmem:[%s204 + $0x1f0] sm:$0xff] %v329
                %v331 = vld [vmem:[%s203 + $0x3f0] sm:$0xff]
                %332 = vst [vmem:[%s204 + $0x1f8] sm:$0xff] %v331
                %v333 = vld [vmem:[%s203 + $0x400] sm:$0xff]
                %334 = vst [vmem:[%s204 + $0x200] sm:$0xff] %v333
                %v335 = vld [vmem:[%s203 + $0x410] sm:$0xff]
                %336 = vst [vmem:[%s204 + $0x208] sm:$0xff] %v335
                %v337 = vld [vmem:[%s203 + $0x420] sm:$0xff]
                %338 = vst [vmem:[%s204 + $0x210] sm:$0xff] %v337
                %v339 = vld [vmem:[%s203 + $0x430] sm:$0xff]
                %340 = vst [vmem:[%s204 + $0x218] sm:$0xff] %v339
                %v341 = vld [vmem:[%s203 + $0x440] sm:$0xff]
                %342 = vst [vmem:[%s204 + $0x220] sm:$0xff] %v341
                %v343 = vld [vmem:[%s203 + $0x450] sm:$0xff]
                %344 = vst [vmem:[%s204 + $0x228] sm:$0xff] %v343
                %v345 = vld [vmem:[%s203 + $0x460] sm:$0xff]
                %346 = vst [vmem:[%s204 + $0x230] sm:$0xff] %v345
                %v347 = vld [vmem:[%s203 + $0x470] sm:$0xff]
                %348 = vst [vmem:[%s204 + $0x238] sm:$0xff] %v347
                %v349 = vld [vmem:[%s203 + $0x480] sm:$0xff]
                %350 = vst [vmem:[%s204 + $0x240] sm:$0xff] %v349
                %v351 = vld [vmem:[%s203 + $0x490] sm:$0xff]
                %352 = vst [vmem:[%s204 + $0x248] sm:$0xff] %v351
                %v353 = vld [vmem:[%s203 + $0x4a0] sm:$0xff]
                %354 = vst [vmem:[%s204 + $0x250] sm:$0xff] %v353
                %v355 = vld [vmem:[%s203 + $0x4b0] sm:$0xff]
                %356 = vst [vmem:[%s204 + $0x258] sm:$0xff] %v355
                %v357 = vld [vmem:[%s203 + $0x4c0] sm:$0xff]
                %358 = vst [vmem:[%s204 + $0x260] sm:$0xff] %v357
                %v359 = vld [vmem:[%s203 + $0x4d0] sm:$0xff]
                %360 = vst [vmem:[%s204 + $0x268] sm:$0xff] %v359
                %v361 = vld [vmem:[%s203 + $0x4e0] sm:$0xff]
                %362 = vst [vmem:[%s204 + $0x270] sm:$0xff] %v361
                %v363 = vld [vmem:[%s203 + $0x4f0] sm:$0xff]
                %364 = vst [vmem:[%s204 + $0x278] sm:$0xff] %v363
                %v365 = vld [vmem:[%s203 + $0x500] sm:$0xff]
                %366 = vst [vmem:[%s204 + $0x280] sm:$0xff] %v365
                %v367 = vld [vmem:[%s203 + $0x510] sm:$0xff]
                %368 = vst [vmem:[%s204 + $0x288] sm:$0xff] %v367
                %v369 = vld [vmem:[%s203 + $0x520] sm:$0xff]
                %370 = vst [vmem:[%s204 + $0x290] sm:$0xff] %v369
                %v371 = vld [vmem:[%s203 + $0x530] sm:$0xff]
                %372 = vst [vmem:[%s204 + $0x298] sm:$0xff] %v371
                %v373 = vld [vmem:[%s203 + $0x540] sm:$0xff]
                %374 = vst [vmem:[%s204 + $0x2a0] sm:$0xff] %v373
                %v375 = vld [vmem:[%s203 + $0x550] sm:$0xff]
                %376 = vst [vmem:[%s204 + $0x2a8] sm:$0xff] %v375
                %v377 = vld [vmem:[%s203 + $0x560] sm:$0xff]
                %378 = vst [vmem:[%s204 + $0x2b0] sm:$0xff] %v377
                %v379 = vld [vmem:[%s203 + $0x570] sm:$0xff]
                %380 = vst [vmem:[%s204 + $0x2b8] sm:$0xff] %v379
                %v381 = vld [vmem:[%s203 + $0x580] sm:$0xff]
                %382 = vst [vmem:[%s204 + $0x2c0] sm:$0xff] %v381
                %v383 = vld [vmem:[%s203 + $0x590] sm:$0xff]
                %384 = vst [vmem:[%s204 + $0x2c8] sm:$0xff] %v383
                %v385 = vld [vmem:[%s203 + $0x5a0] sm:$0xff]
                %386 = vst [vmem:[%s204 + $0x2d0] sm:$0xff] %v385
                %v387 = vld [vmem:[%s203 + $0x5b0] sm:$0xff]
                %388 = vst [vmem:[%s204 + $0x2d8] sm:$0xff] %v387
                %v389 = vld [vmem:[%s203 + $0x5c0] sm:$0xff]
                %390 = vst [vmem:[%s204 + $0x2e0] sm:$0xff] %v389
                %v391 = vld [vmem:[%s203 + $0x5d0] sm:$0xff]
                %392 = vst [vmem:[%s204 + $0x2e8] sm:$0xff] %v391
                %v393 = vld [vmem:[%s203 + $0x5e0] sm:$0xff]
                %394 = vst [vmem:[%s204 + $0x2f0] sm:$0xff] %v393
                %v395 = vld [vmem:[%s203 + $0x5f0] sm:$0xff]
                %396 = vst [vmem:[%s204 + $0x2f8] sm:$0xff] %v395
                %v397 = vld [vmem:[%s203 + $0x600] sm:$0xff]
                %398 = vst [vmem:[%s204 + $0x300] sm:$0xff] %v397
                %v399 = vld [vmem:[%s203 + $0x610] sm:$0xff]
                %400 = vst [vmem:[%s204 + $0x308] sm:$0xff] %v399
                %v401 = vld [vmem:[%s203 + $0x620] sm:$0xff]
                %402 = vst [vmem:[%s204 + $0x310] sm:$0xff] %v401
                %v403 = vld [vmem:[%s203 + $0x630] sm:$0xff]
                %404 = vst [vmem:[%s204 + $0x318] sm:$0xff] %v403
                %v405 = vld [vmem:[%s203 + $0x640] sm:$0xff]
                %406 = vst [vmem:[%s204 + $0x320] sm:$0xff] %v405
                %v407 = vld [vmem:[%s203 + $0x650] sm:$0xff]
                %408 = vst [vmem:[%s204 + $0x328] sm:$0xff] %v407
                %v409 = vld [vmem:[%s203 + $0x660] sm:$0xff]
                %410 = vst [vmem:[%s204 + $0x330] sm:$0xff] %v409
                %v411 = vld [vmem:[%s203 + $0x670] sm:$0xff]
                %412 = vst [vmem:[%s204 + $0x338] sm:$0xff] %v411
                %v413 = vld [vmem:[%s203 + $0x680] sm:$0xff]
                %414 = vst [vmem:[%s204 + $0x340] sm:$0xff] %v413
                %v415 = vld [vmem:[%s203 + $0x690] sm:$0xff]
                %416 = vst [vmem:[%s204 + $0x348] sm:$0xff] %v415
                %v417 = vld [vmem:[%s203 + $0x6a0] sm:$0xff]
                %418 = vst [vmem:[%s204 + $0x350] sm:$0xff] %v417
                %v419 = vld [vmem:[%s203 + $0x6b0] sm:$0xff]
                %420 = vst [vmem:[%s204 + $0x358] sm:$0xff] %v419
                %v421 = vld [vmem:[%s203 + $0x6c0] sm:$0xff]
                %422 = vst [vmem:[%s204 + $0x360] sm:$0xff] %v421
                %v423 = vld [vmem:[%s203 + $0x6d0] sm:$0xff]
                %424 = vst [vmem:[%s204 + $0x368] sm:$0xff] %v423
                %v425 = vld [vmem:[%s203 + $0x6e0] sm:$0xff]
                %426 = vst [vmem:[%s204 + $0x370] sm:$0xff] %v425
                %v427 = vld [vmem:[%s203 + $0x6f0] sm:$0xff]
                %428 = vst [vmem:[%s204 + $0x378] sm:$0xff] %v427
                %v429 = vld [vmem:[%s203 + $0x700] sm:$0xff]
                %430 = vst [vmem:[%s204 + $0x380] sm:$0xff] %v429
                %v431 = vld [vmem:[%s203 + $0x710] sm:$0xff]
                %432 = vst [vmem:[%s204 + $0x388] sm:$0xff] %v431
                %v433 = vld [vmem:[%s203 + $0x720] sm:$0xff]
                %434 = vst [vmem:[%s204 + $0x390] sm:$0xff] %v433
                %v435 = vld [vmem:[%s203 + $0x730] sm:$0xff]
                %436 = vst [vmem:[%s204 + $0x398] sm:$0xff] %v435
                %v437 = vld [vmem:[%s203 + $0x740] sm:$0xff]
                %438 = vst [vmem:[%s204 + $0x3a0] sm:$0xff] %v437
                %v439 = vld [vmem:[%s203 + $0x750] sm:$0xff]
                %440 = vst [vmem:[%s204 + $0x3a8] sm:$0xff] %v439
                %v441 = vld [vmem:[%s203 + $0x760] sm:$0xff]
                %442 = vst [vmem:[%s204 + $0x3b0] sm:$0xff] %v441
                %v443 = vld [vmem:[%s203 + $0x770] sm:$0xff]
                %444 = vst [vmem:[%s204 + $0x3b8] sm:$0xff] %v443
                %v445 = vld [vmem:[%s203 + $0x780] sm:$0xff]
                %446 = vst [vmem:[%s204 + $0x3c0] sm:$0xff] %v445
                %v447 = vld [vmem:[%s203 + $0x790] sm:$0xff]
                %448 = vst [vmem:[%s204 + $0x3c8] sm:$0xff] %v447
                %v449 = vld [vmem:[%s203 + $0x7a0] sm:$0xff]
                %450 = vst [vmem:[%s204 + $0x3d0] sm:$0xff] %v449
                %v451 = vld [vmem:[%s203 + $0x7b0] sm:$0xff]
                %452 = vst [vmem:[%s204 + $0x3d8] sm:$0xff] %v451
                %v453 = vld [vmem:[%s203 + $0x7c0] sm:$0xff]
                %454 = vst [vmem:[%s204 + $0x3e0] sm:$0xff] %v453
                %v455 = vld [vmem:[%s203 + $0x7d0] sm:$0xff]
                %456 = vst [vmem:[%s204 + $0x3e8] sm:$0xff] %v455
                %v457 = vld [vmem:[%s203 + $0x7e0] sm:$0xff]
                %458 = vst [vmem:[%s204 + $0x3f0] sm:$0xff] %v457
                %v459 = vld [vmem:[%s203 + $0x7f0] sm:$0xff]
                %460 = vst [vmem:[%s204 + $0x3f8] sm:$0xff] %v459
              $region45: #{merge_feature_i3d.1} parent=39 // loop_footer
                %s202 = sadd.s32 1, %s198
              $region46: #{merge_feature_i3d.1} parent=39 // loop_footer_branch
                %197 = sbr.rel target = $region42
              $region47: #{merge_feature_i3d.1} parent=39 // loop_exit
                _
            $region40: #{merge_feature_i3d.1} parent=31 // pred_fallthru
              _
          $region32: #{merge_feature_i3d.1} parent=27 // pred_fallthru
            _
          %729 = vnop
        $region28: #{merge_feature_i3d.1} parent=23 // pred_fallthru
          _
        // Predicated region
        $region63: #{merge_feature_i3d.1} parent=23 // pred_check
          %p730 = pneg %p94
        $region64: #{merge_feature_i3d.1} parent=23 // pred_check_branch
          %732 = sbr.rel (%p730) target = $region66
        $region65: #{merge_feature_i3d.1} parent=23 // pred_region
          %p733 = scmp.lt.s32.totalorder %s17, 1
          %s734 = scalar_select %p733, %s17, 1
          %s735 = scalar_lea.vmem %s2, %s734
        $region66: #{merge_feature_i3d.1} parent=23 // pred_fallthru
          _
      $region24: #{merge_feature_i3d.1} parent=5 // pred_fallthru
        _
      %p736 = scmp.le.s32.totalorder 1, %s10
      %p737 = scmp.lt.s32.totalorder %s10, 3
      %p738 = pnand %p736, %p737
      %p739 = pneg %p738
      // Predicated region
      $region67: #{merge_feature_i3d.1} parent=5 // pred_check
        _
      $region68: #{merge_feature_i3d.1} parent=5 // pred_check_branch
        %741 = sbr.rel (%p738) target = $region70
      $region69: #{merge_feature_i3d.1} parent=5 // pred_region
        %s742 = ssub.s32 %s10, 1
        %s743 = sand.u32 %s61, 1
        %s744 = sand.u32 %s61, 1
        %s745 = smul.addr %s744, 1024
        %s746 = scalar_lea.vmem [#allocation2], %s745
        // Predicated region
        $region71: #{merge_feature_i3d.1} parent=69 // pred_check
          %p747 = pneg %p74
        $region72: #{merge_feature_i3d.1} parent=69 // pred_check_branch
          %749 = sbr.rel (%p747) target = $region74
        $region73: #{merge_feature_i3d.1} parent=69 // pred_region
          _
        $region74: #{merge_feature_i3d.1} parent=69 // pred_fallthru
          _
        %s750 = smul.u32 14, %s20
        %p751 = scmp.lt.s32.totalorder %s750, 13
        %s752 = scalar_select %p751, %s750, 13
        %s753 = smul.addr %s752, 8
        %s754 = smul.addr %s753, 8
        %s755 = scalar_lea.vmem %s0, %s754
        %p756 = pneg %p48
        %p757 = pneg %p45
        %s758 = sand.u32 %s61, 1
        %s759 = sand.u32 %s61, 1
        %s760 = smul.addr %s759, 1024
        %s761 = scalar_lea.vmem [#allocation2], %s760
        %p762 = pneg %p74
        %p763 = pneg %p71
        %p764 = scmp.lt.s32.totalorder %s19, 1
        %s765 = scalar_select %p764, %s19, 1
        %s766 = scalar_lea.vmem %s2, %s765
        %p767 = pneg %p100
        %p768 = pneg %p97
        %p769 = pneg %p121
        %p770 = pneg %p118
        %p771 = pneg %p149
        %p772 = pneg %p146
        %s773 = sand.u32 %s136, 1
        %s774 = sand.u32 %s136, 1
        %s775 = smul.addr %s774, 512
        %s776 = scalar_lea.vmem [#allocation3], %s775
        %s777 = smul.u32 14, %s20
        %p778 = scmp.lt.s32.totalorder %s777, 13
        %s779 = scalar_select %p778, %s777, 13
        %s780 = smul.addr %s779, 8
        %s781 = smul.addr %s780, 8
        %s782 = scalar_lea.vmem %s0, %s781
        %s783 = smul.u32 14, %s20
        %p784 = scmp.lt.s32.totalorder %s19, 1
        %s785 = scalar_select %p784, %s19, 1
        %s786 = scalar_lea.vmem %s2, %s785
        %s787 = smul.u32 2, %s20
        %s788 = smul.u32 16, %s19
        %v789 = vld [vmem:[%s782] sm:$0xff]
        %v790 = vld [vmem:[%s782 + $0x8] sm:$0xff]
        %v791 = vld [vmem:[%s782 + $0x10] sm:$0xff]
        %v792 = vld [vmem:[%s782 + $0x18] sm:$0xff]
        %v793 = vld [vmem:[%s782 + $0x20] sm:$0xff]
        %v794 = vld [vmem:[%s782 + $0x28] sm:$0xff]
        %v795 = vld [vmem:[%s782 + $0x30] sm:$0xff]
        %v796 = vld [vmem:[%s782 + $0x38] sm:$0xff]
        %v797 = vld [vmem:[%s782 + $0x40] sm:$0xff]
        %v798 = vld [vmem:[%s782 + $0x48] sm:$0xff]
        %v799 = vld [vmem:[%s782 + $0x50] sm:$0xff]
        %v800 = vld [vmem:[%s782 + $0x58] sm:$0xff]
        %v801 = vld [vmem:[%s782 + $0x60] sm:$0xff]
        %v802 = vld [vmem:[%s782 + $0x68] sm:$0xff]
        %v803 = vld [vmem:[%s782 + $0x70] sm:$0xff]
        %v804 = vld [vmem:[%s782 + $0x78] sm:$0xff]
        %v805 = vld [vmem:[%s782 + $0x80] sm:$0xff]
        %v806 = vld [vmem:[%s782 + $0x88] sm:$0xff]
        %v807 = vld [vmem:[%s782 + $0x90] sm:$0xff]
        %v808 = vld [vmem:[%s782 + $0x98] sm:$0xff]
        %v809 = vld [vmem:[%s782 + $0xa0] sm:$0xff]
        %v810 = vld [vmem:[%s782 + $0xa8] sm:$0xff]
        %v811 = vld [vmem:[%s782 + $0xb0] sm:$0xff]
        %v812 = vld [vmem:[%s782 + $0xb8] sm:$0xff]
        %v813 = vld [vmem:[%s782 + $0xc0] sm:$0xff]
        %v814 = vld [vmem:[%s782 + $0xc8] sm:$0xff]
        %v815 = vld [vmem:[%s782 + $0xd0] sm:$0xff]
        %v816 = vld [vmem:[%s782 + $0xd8] sm:$0xff]
        %v817 = vld [vmem:[%s782 + $0xe0] sm:$0xff]
        %v818 = vld [vmem:[%s782 + $0xe8] sm:$0xff]
        %v819 = vld [vmem:[%s782 + $0xf0] sm:$0xff]
        %v820 = vld [vmem:[%s782 + $0xf8] sm:$0xff]
        %v821 = vld [vmem:[%s782 + $0x100] sm:$0xff]
        %v822 = vld [vmem:[%s782 + $0x108] sm:$0xff]
        %v823 = vld [vmem:[%s782 + $0x110] sm:$0xff]
        %v824 = vld [vmem:[%s782 + $0x118] sm:$0xff]
        %v825 = vld [vmem:[%s782 + $0x120] sm:$0xff]
        %v826 = vld [vmem:[%s782 + $0x128] sm:$0xff]
        %v827 = vld [vmem:[%s782 + $0x130] sm:$0xff]
        %v828 = vld [vmem:[%s782 + $0x138] sm:$0xff]
        %v829 = vld [vmem:[%s782 + $0x140] sm:$0xff]
        %v830 = vld [vmem:[%s782 + $0x148] sm:$0xff]
        %v831 = vld [vmem:[%s782 + $0x150] sm:$0xff]
        %v832 = vld [vmem:[%s782 + $0x158] sm:$0xff]
        %v833 = vld [vmem:[%s782 + $0x160] sm:$0xff]
        %v834 = vld [vmem:[%s782 + $0x168] sm:$0xff]
        %v835 = vld [vmem:[%s782 + $0x170] sm:$0xff]
        %v836 = vld [vmem:[%s782 + $0x178] sm:$0xff]
        %v837 = vld [vmem:[%s782 + $0x180] sm:$0xff]
        %v838 = vld [vmem:[%s782 + $0x188] sm:$0xff]
        %v839 = vld [vmem:[%s782 + $0x190] sm:$0xff]
        %v840 = vld [vmem:[%s782 + $0x198] sm:$0xff]
        %v841 = vld [vmem:[%s782 + $0x1a0] sm:$0xff]
        %v842 = vld [vmem:[%s782 + $0x1a8] sm:$0xff]
        %v843 = vld [vmem:[%s782 + $0x1b0] sm:$0xff]
        %v844 = vld [vmem:[%s782 + $0x1b8] sm:$0xff]
        %v845 = vld [vmem:[%s782 + $0x1c0] sm:$0xff]
        %v846 = vld [vmem:[%s782 + $0x1c8] sm:$0xff]
        %v847 = vld [vmem:[%s782 + $0x1d0] sm:$0xff]
        %v848 = vld [vmem:[%s782 + $0x1d8] sm:$0xff]
        %v849 = vld [vmem:[%s782 + $0x1e0] sm:$0xff]
        %v850 = vld [vmem:[%s782 + $0x1e8] sm:$0xff]
        %v851 = vld [vmem:[%s782 + $0x1f0] sm:$0xff]
        %v852 = vld [vmem:[%s782 + $0x1f8] sm:$0xff]
        %v853 = vld [vmem:[%s782 + $0x200] sm:$0xff]
        %v854 = vld [vmem:[%s782 + $0x208] sm:$0xff]
        %v855 = vld [vmem:[%s782 + $0x210] sm:$0xff]
        %v856 = vld [vmem:[%s782 + $0x218] sm:$0xff]
        %v857 = vld [vmem:[%s782 + $0x220] sm:$0xff]
        %v858 = vld [vmem:[%s782 + $0x228] sm:$0xff]
        %v859 = vld [vmem:[%s782 + $0x230] sm:$0xff]
        %v860 = vld [vmem:[%s782 + $0x238] sm:$0xff]
        %v861 = vld [vmem:[%s782 + $0x240] sm:$0xff]
        %v862 = vld [vmem:[%s782 + $0x248] sm:$0xff]
        %v863 = vld [vmem:[%s782 + $0x250] sm:$0xff]
        %v864 = vld [vmem:[%s782 + $0x258] sm:$0xff]
        %v865 = vld [vmem:[%s782 + $0x260] sm:$0xff]
        %v866 = vld [vmem:[%s782 + $0x268] sm:$0xff]
        %v867 = vld [vmem:[%s782 + $0x270] sm:$0xff]
        %v868 = vld [vmem:[%s782 + $0x278] sm:$0xff]
        %v869 = vld [vmem:[%s782 + $0x280] sm:$0xff]
        %v870 = vld [vmem:[%s782 + $0x288] sm:$0xff]
        %v871 = vld [vmem:[%s782 + $0x290] sm:$0xff]
        %v872 = vld [vmem:[%s782 + $0x298] sm:$0xff]
        %v873 = vld [vmem:[%s782 + $0x2a0] sm:$0xff]
        %v874 = vld [vmem:[%s782 + $0x2a8] sm:$0xff]
        %v875 = vld [vmem:[%s782 + $0x2b0] sm:$0xff]
        %v876 = vld [vmem:[%s782 + $0x2b8] sm:$0xff]
        %v877 = vld [vmem:[%s782 + $0x2c0] sm:$0xff]
        %v878 = vld [vmem:[%s782 + $0x2c8] sm:$0xff]
        %v879 = vld [vmem:[%s782 + $0x2d0] sm:$0xff]
        %v880 = vld [vmem:[%s782 + $0x2d8] sm:$0xff]
        %v881 = vld [vmem:[%s782 + $0x2e0] sm:$0xff]
        %v882 = vld [vmem:[%s782 + $0x2e8] sm:$0xff]
        %v883 = vld [vmem:[%s782 + $0x2f0] sm:$0xff]
        %v884 = vld [vmem:[%s782 + $0x2f8] sm:$0xff]
        %v885 = vld [vmem:[%s782 + $0x300] sm:$0xff]
        %v886 = vld [vmem:[%s782 + $0x308] sm:$0xff]
        %v887 = vld [vmem:[%s782 + $0x310] sm:$0xff]
        %v888 = vld [vmem:[%s782 + $0x318] sm:$0xff]
        %v889 = vld [vmem:[%s782 + $0x320] sm:$0xff]
        %v890 = vld [vmem:[%s782 + $0x328] sm:$0xff]
        %v891 = vld [vmem:[%s782 + $0x330] sm:$0xff]
        %v892 = vld [vmem:[%s782 + $0x338] sm:$0xff]
        %v893 = vld [vmem:[%s782 + $0x340] sm:$0xff]
        %v894 = vld [vmem:[%s782 + $0x348] sm:$0xff]
        %v895 = vld [vmem:[%s782 + $0x350] sm:$0xff]
        %v896 = vld [vmem:[%s782 + $0x358] sm:$0xff]
        %v897 = vld [vmem:[%s782 + $0x360] sm:$0xff]
        %v898 = vld [vmem:[%s782 + $0x368] sm:$0xff]
        %v899 = vld [vmem:[%s782 + $0x370] sm:$0xff]
        %v900 = vld [vmem:[%s782 + $0x378] sm:$0xff]
        %v901 = vld [vmem:[%s746] sm:$0xff]
        %v902 = vld [vmem:[%s746 + $0x8] sm:$0xff]
        %v903 = vld [vmem:[%s746 + $0x10] sm:$0xff]
        %v904 = vld [vmem:[%s746 + $0x18] sm:$0xff]
        %v905 = vld [vmem:[%s746 + $0x20] sm:$0xff]
        %v906 = vld [vmem:[%s746 + $0x28] sm:$0xff]
        %v907 = vld [vmem:[%s746 + $0x30] sm:$0xff]
        %v908 = vld [vmem:[%s746 + $0x38] sm:$0xff]
        %v909 = vld [vmem:[%s746 + $0x40] sm:$0xff]
        %v910 = vld [vmem:[%s746 + $0x48] sm:$0xff]
        %v911 = vld [vmem:[%s746 + $0x50] sm:$0xff]
        %v912 = vld [vmem:[%s746 + $0x58] sm:$0xff]
        %v913 = vld [vmem:[%s746 + $0x60] sm:$0xff]
        %v914 = vld [vmem:[%s746 + $0x68] sm:$0xff]
        %v915 = vld [vmem:[%s746 + $0x70] sm:$0xff]
        %v916 = vld [vmem:[%s746 + $0x78] sm:$0xff]
        %v917 = vld [vmem:[%s746 + $0x80] sm:$0xff]
        %v918 = vld [vmem:[%s746 + $0x88] sm:$0xff]
        %v919 = vld [vmem:[%s746 + $0x90] sm:$0xff]
        %v920 = vld [vmem:[%s746 + $0x98] sm:$0xff]
        %v921 = vld [vmem:[%s746 + $0xa0] sm:$0xff]
        %v922 = vld [vmem:[%s746 + $0xa8] sm:$0xff]
        %v923 = vld [vmem:[%s746 + $0xb0] sm:$0xff]
        %v924 = vld [vmem:[%s746 + $0xb8] sm:$0xff]
        %v925 = vld [vmem:[%s746 + $0xc0] sm:$0xff]
        %v926 = vld [vmem:[%s746 + $0xc8] sm:$0xff]
        %v927 = vld [vmem:[%s746 + $0xd0] sm:$0xff]
        %v928 = vld [vmem:[%s746 + $0xd8] sm:$0xff]
        %v929 = vld [vmem:[%s746 + $0xe0] sm:$0xff]
        %v930 = vld [vmem:[%s746 + $0xe8] sm:$0xff]
        %v931 = vld [vmem:[%s746 + $0xf0] sm:$0xff]
        %v932 = vld [vmem:[%s746 + $0xf8] sm:$0xff]
        %v933 = vld [vmem:[%s746 + $0x100] sm:$0xff]
        %v934 = vld [vmem:[%s746 + $0x108] sm:$0xff]
        %v935 = vld [vmem:[%s746 + $0x110] sm:$0xff]
        %v936 = vld [vmem:[%s746 + $0x118] sm:$0xff]
        %v937 = vld [vmem:[%s746 + $0x120] sm:$0xff]
        %v938 = vld [vmem:[%s746 + $0x128] sm:$0xff]
        %v939 = vld [vmem:[%s746 + $0x130] sm:$0xff]
        %v940 = vld [vmem:[%s746 + $0x138] sm:$0xff]
        %v941 = vld [vmem:[%s746 + $0x140] sm:$0xff]
        %v942 = vld [vmem:[%s746 + $0x148] sm:$0xff]
        %v943 = vld [vmem:[%s746 + $0x150] sm:$0xff]
        %v944 = vld [vmem:[%s746 + $0x158] sm:$0xff]
        %v945 = vld [vmem:[%s746 + $0x160] sm:$0xff]
        %v946 = vld [vmem:[%s746 + $0x168] sm:$0xff]
        %v947 = vld [vmem:[%s746 + $0x170] sm:$0xff]
        %v948 = vld [vmem:[%s746 + $0x178] sm:$0xff]
        %v949 = vld [vmem:[%s746 + $0x180] sm:$0xff]
        %v950 = vld [vmem:[%s746 + $0x188] sm:$0xff]
        %v951 = vld [vmem:[%s746 + $0x190] sm:$0xff]
        %v952 = vld [vmem:[%s746 + $0x198] sm:$0xff]
        %v953 = vld [vmem:[%s746 + $0x1a0] sm:$0xff]
        %v954 = vld [vmem:[%s746 + $0x1a8] sm:$0xff]
        %v955 = vld [vmem:[%s746 + $0x1b0] sm:$0xff]
        %v956 = vld [vmem:[%s746 + $0x1b8] sm:$0xff]
        %v957 = vld [vmem:[%s746 + $0x1c0] sm:$0xff]
        %v958 = vld [vmem:[%s746 + $0x1c8] sm:$0xff]
        %v959 = vld [vmem:[%s746 + $0x1d0] sm:$0xff]
        %v960 = vld [vmem:[%s746 + $0x1d8] sm:$0xff]
        %v961 = vld [vmem:[%s746 + $0x1e0] sm:$0xff]
        %v962 = vld [vmem:[%s746 + $0x1e8] sm:$0xff]
        %v963 = vld [vmem:[%s746 + $0x1f0] sm:$0xff]
        %v964 = vld [vmem:[%s746 + $0x1f8] sm:$0xff]
        %v965 = vld [vmem:[%s746 + $0x200] sm:$0xff]
        %v966 = vld [vmem:[%s746 + $0x208] sm:$0xff]
        %v967 = vld [vmem:[%s746 + $0x210] sm:$0xff]
        %v968 = vld [vmem:[%s746 + $0x218] sm:$0xff]
        %v969 = vld [vmem:[%s746 + $0x220] sm:$0xff]
        %v970 = vld [vmem:[%s746 + $0x228] sm:$0xff]
        %v971 = vld [vmem:[%s746 + $0x230] sm:$0xff]
        %v972 = vld [vmem:[%s746 + $0x238] sm:$0xff]
        %v973 = vld [vmem:[%s746 + $0x240] sm:$0xff]
        %v974 = vld [vmem:[%s746 + $0x248] sm:$0xff]
        %v975 = vld [vmem:[%s746 + $0x250] sm:$0xff]
        %v976 = vld [vmem:[%s746 + $0x258] sm:$0xff]
        %v977 = vld [vmem:[%s746 + $0x260] sm:$0xff]
        %v978 = vld [vmem:[%s746 + $0x268] sm:$0xff]
        %v979 = vld [vmem:[%s746 + $0x270] sm:$0xff]
        %v980 = vld [vmem:[%s746 + $0x278] sm:$0xff]
        %v981 = vld [vmem:[%s746 + $0x280] sm:$0xff]
        %v982 = vld [vmem:[%s746 + $0x288] sm:$0xff]
        %v983 = vld [vmem:[%s746 + $0x290] sm:$0xff]
        %v984 = vld [vmem:[%s746 + $0x298] sm:$0xff]
        %v985 = vld [vmem:[%s746 + $0x2a0] sm:$0xff]
        %v986 = vld [vmem:[%s746 + $0x2a8] sm:$0xff]
        %v987 = vld [vmem:[%s746 + $0x2b0] sm:$0xff]
        %v988 = vld [vmem:[%s746 + $0x2b8] sm:$0xff]
        %v989 = vld [vmem:[%s746 + $0x2c0] sm:$0xff]
        %v990 = vld [vmem:[%s746 + $0x2c8] sm:$0xff]
        %v991 = vld [vmem:[%s746 + $0x2d0] sm:$0xff]
        %v992 = vld [vmem:[%s746 + $0x2d8] sm:$0xff]
        %v993 = vld [vmem:[%s746 + $0x2e0] sm:$0xff]
        %v994 = vld [vmem:[%s746 + $0x2e8] sm:$0xff]
        %v995 = vld [vmem:[%s746 + $0x2f0] sm:$0xff]
        %v996 = vld [vmem:[%s746 + $0x2f8] sm:$0xff]
        %v997 = vld [vmem:[%s746 + $0x300] sm:$0xff]
        %v998 = vld [vmem:[%s746 + $0x308] sm:$0xff]
        %v999 = vld [vmem:[%s746 + $0x310] sm:$0xff]
        %v1000 = vld [vmem:[%s746 + $0x318] sm:$0xff]
        %v1001 = vld [vmem:[%s746 + $0x320] sm:$0xff]
        %v1002 = vld [vmem:[%s746 + $0x328] sm:$0xff]
        %v1003 = vld [vmem:[%s746 + $0x330] sm:$0xff]
        %v1004 = vld [vmem:[%s746 + $0x338] sm:$0xff]
        %v1005 = vld [vmem:[%s746 + $0x340] sm:$0xff]
        %v1006 = vld [vmem:[%s746 + $0x348] sm:$0xff]
        %v1007 = vld [vmem:[%s746 + $0x350] sm:$0xff]
        %v1008 = vld [vmem:[%s746 + $0x358] sm:$0xff]
        %v1009 = vld [vmem:[%s746 + $0x360] sm:$0xff]
        %v1010 = vld [vmem:[%s746 + $0x368] sm:$0xff]
        %v1011 = vld [vmem:[%s746 + $0x370] sm:$0xff]
        %v1012 = vld [vmem:[%s746 + $0x378] sm:$0xff]
        %v1013 = vld [vmem:[%s746 + $0x380] sm:$0xff]
        %v1014 = vld [vmem:[%s746 + $0x388] sm:$0xff]
        %v1015 = vld [vmem:[%s746 + $0x390] sm:$0xff]
        %v1016 = vld [vmem:[%s746 + $0x398] sm:$0xff]
        %v1017 = vld [vmem:[%s746 + $0x3a0] sm:$0xff]
        %v1018 = vld [vmem:[%s746 + $0x3a8] sm:$0xff]
        %v1019 = vld [vmem:[%s746 + $0x3b0] sm:$0xff]
        %v1020 = vld [vmem:[%s746 + $0x3b8] sm:$0xff]
        %v1021 = vld [vmem:[%s746 + $0x3c0] sm:$0xff]
        %v1022 = vld [vmem:[%s746 + $0x3c8] sm:$0xff]
        %v1023 = vld [vmem:[%s746 + $0x3d0] sm:$0xff]
        %v1024 = vld [vmem:[%s746 + $0x3d8] sm:$0xff]
        %v1025 = vld [vmem:[%s746 + $0x3e0] sm:$0xff]
        %v1026 = vld [vmem:[%s746 + $0x3e8] sm:$0xff]
        %v1027 = vld [vmem:[%s746 + $0x3f0] sm:$0xff]
        %v1028 = vld [vmem:[%s746 + $0x3f8] sm:$0xff]
        %v1029 = vld [vmem:[%s786] sm:$0x1]
        %v1031 = vlaneseq
        %v1032 = vshrl.u32 %v1031, 7
        %v1033 = vsub.s32 0, %v1032
        %v1034 = vrot.slane %v1029, %v1033
        %1036 = vmatprep.subr.mxu0 0.0
        %1037 = vmatpush1.msra.mxu0 %v901
        %1038 = vmatprep.subr.mxu0 0.0
        %1039 = vmatpush1.msra.mxu0 %v902
        %1040 = vmatprep.subr.mxu0 0.0
        %1041 = vmatpush1.msra.mxu0 %v903
        %1042 = vmatprep.subr.mxu0 0.0
        %1043 = vmatpush1.msra.mxu0 %v904
        %1044 = vmatprep.subr.mxu0 0.0
        %1045 = vmatpush1.msra.mxu0 %v905
        %1046 = vmatprep.subr.mxu0 0.0
        %1047 = vmatpush1.msra.mxu0 %v906
        %1048 = vmatprep.subr.mxu0 0.0
        %1049 = vmatpush1.msra.mxu0 %v907
        %1050 = vmatprep.subr.mxu0 0.0
        %1051 = vmatpush1.msra.mxu0 %v908
        %1052 = vmatprep.subr.mxu0 0.0
        %1053 = vmatpush1.msra.mxu0 %v909
        %1054 = vmatprep.subr.mxu0 0.0
        %1055 = vmatpush1.msra.mxu0 %v910
        %1056 = vmatprep.subr.mxu0 0.0
        %1057 = vmatpush1.msra.mxu0 %v911
        %1058 = vmatprep.subr.mxu0 0.0
        %1059 = vmatpush1.msra.mxu0 %v912
        %1060 = vmatprep.subr.mxu0 0.0
        %1061 = vmatpush1.msra.mxu0 %v913
        %1062 = vmatprep.subr.mxu0 0.0
        %1063 = vmatpush1.msra.mxu0 %v914
        %1064 = vmatprep.subr.mxu0 0.0
        %1065 = vmatpush1.msra.mxu0 %v915
        %1066 = vmatprep.subr.mxu0 0.0
        %1067 = vmatpush1.msra.mxu0 %v916
        %1068 = vmatprep.subr.mxu0 0.0
        %1069 = vmatpush1.msra.mxu0 %v917
        %1070 = vmatprep.subr.mxu0 0.0
        %1071 = vmatpush1.msra.mxu0 %v918
        %1072 = vmatprep.subr.mxu0 0.0
        %1073 = vmatpush1.msra.mxu0 %v919
        %1074 = vmatprep.subr.mxu0 0.0
        %1075 = vmatpush1.msra.mxu0 %v920
        %1076 = vmatprep.subr.mxu0 0.0
        %1077 = vmatpush1.msra.mxu0 %v921
        %1078 = vmatprep.subr.mxu0 0.0
        %1079 = vmatpush1.msra.mxu0 %v922
        %1080 = vmatprep.subr.mxu0 0.0
        %1081 = vmatpush1.msra.mxu0 %v923
        %1082 = vmatprep.subr.mxu0 0.0
        %1083 = vmatpush1.msra.mxu0 %v924
        %1084 = vmatprep.subr.mxu0 0.0
        %1085 = vmatpush1.msra.mxu0 %v925
        %1086 = vmatprep.subr.mxu0 0.0
        %1087 = vmatpush1.msra.mxu0 %v926
        %1088 = vmatprep.subr.mxu0 0.0
        %1089 = vmatpush1.msra.mxu0 %v927
        %1090 = vmatprep.subr.mxu0 0.0
        %1091 = vmatpush1.msra.mxu0 %v928
        %1092 = vmatprep.subr.mxu0 0.0
        %1093 = vmatpush1.msra.mxu0 %v929
        %1094 = vmatprep.subr.mxu0 0.0
        %1095 = vmatpush1.msra.mxu0 %v930
        %1096 = vmatprep.subr.mxu0 0.0
        %1097 = vmatpush1.msra.mxu0 %v931
        %1098 = vmatprep.subr.mxu0 0.0
        %1099 = vmatpush1.msra.mxu0 %v932
        %1100 = vmatprep.mubr.f32.mxu0 %v790
        %1101 = vmatmul.mubr.f32.gmra.mrb[0].mxu0 %v789
        %v1102 = vpop.f32.mrb[0].mxu0
        %v1103 = vadd.f32 %v1034, %v1102
        %v1104 = vpop.f32.mrb[0].mxu0
        %1105 = vmatprep.mubr.f32.mxu0 %v798
        %1106 = vmatmul.mubr.f32.gmra.mrb[0].mxu0 %v797
        %v1107 = vpop.f32.mrb[0].mxu0
        %v1108 = vadd.f32 %v1034, %v1107
        %v1109 = vpop.f32.mrb[0].mxu0
        %1110 = vmatprep.mubr.f32.mxu0 %v806
        %1111 = vmatmul.mubr.f32.gmra.mrb[0].mxu0 %v805
        %v1112 = vpop.f32.mrb[0].mxu0
        %v1113 = vadd.f32 %v1034, %v1112
        %v1114 = vpop.f32.mrb[0].mxu0
        %1115 = vmatprep.mubr.f32.mxu0 %v814
        %1116 = vmatmul.mubr.f32.gmra.mrb[0].mxu0 %v813
        %v1117 = vpop.f32.mrb[0].mxu0
        %v1118 = vadd.f32 %v1034, %v1117
        %v1119 = vpop.f32.mrb[0].mxu0
        %1120 = vmatprep.mubr.f32.mxu0 %v822
        %1121 = vmatmul.mubr.f32.gmra.mrb[0].mxu0 %v821
        %v1122 = vpop.f32.mrb[0].mxu0
        %v1123 = vadd.f32 %v1034, %v1122
        %v1124 = vpop.f32.mrb[0].mxu0
        %1125 = vmatprep.mubr.f32.mxu0 %v830
        %1126 = vmatmul.mubr.f32.gmra.mrb[0].mxu0 %v829
        %v1127 = vpop.f32.mrb[0].mxu0
        %v1128 = vadd.f32 %v1034, %v1127
        %v1129 = vpop.f32.mrb[0].mxu0
        %1130 = vmatprep.mubr.f32.mxu0 %v838
        %1131 = vmatmul.mubr.f32.gmra.mrb[0].mxu0 %v837
        %v1132 = vpop.f32.mrb[0].mxu0
        %v1133 = vadd.f32 %v1034, %v1132
        %v1134 = vpop.f32.mrb[0].mxu0
        %1135 = vmatprep.mubr.f32.mxu0 %v846
        %1136 = vmatmul.mubr.f32.gmra.mrb[0].mxu0 %v845
        %v1137 = vpop.f32.mrb[0].mxu0
        %v1138 = vadd.f32 %v1034, %v1137
        %v1139 = vpop.f32.mrb[0].mxu0
        %1140 = vmatprep.mubr.f32.mxu0 %v854
        %1141 = vmatmul.mubr.f32.gmra.mrb[0].mxu0 %v853
        %v1142 = vpop.f32.mrb[0].mxu0
        %v1143 = vadd.f32 %v1034, %v1142
        %v1144 = vpop.f32.mrb[0].mxu0
        %1145 = vmatprep.mubr.f32.mxu0 %v862
        %1146 = vmatmul.mubr.f32.gmra.mrb[0].mxu0 %v861
        %v1147 = vpop.f32.mrb[0].mxu0
        %v1148 = vadd.f32 %v1034, %v1147
        %v1149 = vpop.f32.mrb[0].mxu0
        %1150 = vmatprep.mubr.f32.mxu0 %v870
        %1151 = vmatmul.mubr.f32.gmra.mrb[0].mxu0 %v869
        %v1152 = vpop.f32.mrb[0].mxu0
        %v1153 = vadd.f32 %v1034, %v1152
        %v1154 = vpop.f32.mrb[0].mxu0
        %1155 = vmatprep.mubr.f32.mxu0 %v878
        %1156 = vmatmul.mubr.f32.gmra.mrb[0].mxu0 %v877
        %v1157 = vpop.f32.mrb[0].mxu0
        %v1158 = vadd.f32 %v1034, %v1157
        %v1159 = vpop.f32.mrb[0].mxu0
        %1160 = vmatprep.mubr.f32.mxu0 %v886
        %1161 = vmatmul.mubr.f32.gmra.mrb[0].mxu0 %v885
        %v1162 = vpop.f32.mrb[0].mxu0
        %v1163 = vadd.f32 %v1034, %v1162
        %v1164 = vpop.f32.mrb[0].mxu0
        %1165 = vmatprep.mubr.f32.mxu0 %v894
        %1166 = vmatmul.mubr.f32.gmra.mrb[0].mxu0 %v893
        %v1167 = vpop.f32.mrb[0].mxu0
        %v1168 = vadd.f32 %v1034, %v1167
        %v1169 = vpop.f32.mrb[0].mxu0
        %1170 = vdwg.mxu0
        %1171 = vmatprep.subr.mxu0 0.0
        %1172 = vmatpush1.msra.mxu0 %v933
        %1173 = vmatprep.subr.mxu0 0.0
        %1174 = vmatpush1.msra.mxu0 %v934
        %1175 = vmatprep.subr.mxu0 0.0
        %1176 = vmatpush1.msra.mxu0 %v935
        %1177 = vmatprep.subr.mxu0 0.0
        %1178 = vmatpush1.msra.mxu0 %v936
        %1179 = vmatprep.subr.mxu0 0.0
        %1180 = vmatpush1.msra.mxu0 %v937
        %1181 = vmatprep.subr.mxu0 0.0
        %1182 = vmatpush1.msra.mxu0 %v938
        %1183 = vmatprep.subr.mxu0 0.0
        %1184 = vmatpush1.msra.mxu0 %v939
        %1185 = vmatprep.subr.mxu0 0.0
        %1186 = vmatpush1.msra.mxu0 %v940
        %1187 = vmatprep.subr.mxu0 0.0
        %1188 = vmatpush1.msra.mxu0 %v941
        %1189 = vmatprep.subr.mxu0 0.0
        %1190 = vmatpush1.msra.mxu0 %v942
        %1191 = vmatprep.subr.mxu0 0.0
        %1192 = vmatpush1.msra.mxu0 %v943
        %1193 = vmatprep.subr.mxu0 0.0
        %1194 = vmatpush1.msra.mxu0 %v944
        %1195 = vmatprep.subr.mxu0 0.0
        %1196 = vmatpush1.msra.mxu0 %v945
        %1197 = vmatprep.subr.mxu0 0.0
        %1198 = vmatpush1.msra.mxu0 %v946
        %1199 = vmatprep.subr.mxu0 0.0
        %1200 = vmatpush1.msra.mxu0 %v947
        %1201 = vmatprep.subr.mxu0 0.0
        %1202 = vmatpush1.msra.mxu0 %v948
        %1203 = vmatprep.subr.mxu0 0.0
        %1204 = vmatpush1.msra.mxu0 %v949
        %1205 = vmatprep.subr.mxu0 0.0
        %1206 = vmatpush1.msra.mxu0 %v950
        %1207 = vmatprep.subr.mxu0 0.0
        %1208 = vmatpush1.msra.mxu0 %v951
        %1209 = vmatprep.subr.mxu0 0.0
        %1210 = vmatpush1.msra.mxu0 %v952
        %1211 = vmatprep.subr.mxu0 0.0
        %1212 = vmatpush1.msra.mxu0 %v953
        %1213 = vmatprep.subr.mxu0 0.0
        %1214 = vmatpush1.msra.mxu0 %v954
        %1215 = vmatprep.subr.mxu0 0.0
        %1216 = vmatpush1.msra.mxu0 %v955
        %1217 = vmatprep.subr.mxu0 0.0
        %1218 = vmatpush1.msra.mxu0 %v956
        %1219 = vmatprep.subr.mxu0 0.0
        %1220 = vmatpush1.msra.mxu0 %v957
        %1221 = vmatprep.subr.mxu0 0.0
        %1222 = vmatpush1.msra.mxu0 %v958
        %1223 = vmatprep.subr.mxu0 0.0
        %1224 = vmatpush1.msra.mxu0 %v959
        %1225 = vmatprep.subr.mxu0 0.0
        %1226 = vmatpush1.msra.mxu0 %v960
        %1227 = vmatprep.subr.mxu0 0.0
        %1228 = vmatpush1.msra.mxu0 %v961
        %1229 = vmatprep.subr.mxu0 0.0
        %1230 = vmatpush1.msra.mxu0 %v962
        %1231 = vmatprep.subr.mxu0 0.0
        %1232 = vmatpush1.msra.mxu0 %v963
        %1233 = vmatprep.subr.mxu0 0.0
        %1234 = vmatpush1.msra.mxu0 %v964
        %1235 = vmatprep.mubr.f32.mxu0 %v792
        %1236 = vmatmul.mubr.f32.gmra.mrb[0].mxu0 %v791
        %v1237 = vpop.f32.mrb[0].mxu0
        %v1238 = vadd.f32 %v1103, %v1237
        %v1239 = vpop.f32.mrb[0].mxu0
        %1240 = vmatprep.mubr.f32.mxu0 %v800
        %1241 = vmatmul.mubr.f32.gmra.mrb[0].mxu0 %v799
        %v1242 = vpop.f32.mrb[0].mxu0
        %v1243 = vadd.f32 %v1108, %v1242
        %v1244 = vpop.f32.mrb[0].mxu0
        %1245 = vmatprep.mubr.f32.mxu0 %v808
        %1246 = vmatmul.mubr.f32.gmra.mrb[0].mxu0 %v807
        %v1247 = vpop.f32.mrb[0].mxu0
        %v1248 = vadd.f32 %v1113, %v1247
        %v1249 = vpop.f32.mrb[0].mxu0
        %1250 = vmatprep.mubr.f32.mxu0 %v816
        %1251 = vmatmul.mubr.f32.gmra.mrb[0].mxu0 %v815
        %v1252 = vpop.f32.mrb[0].mxu0
        %v1253 = vadd.f32 %v1118, %v1252
        %v1254 = vpop.f32.mrb[0].mxu0
        %1255 = vmatprep.mubr.f32.mxu0 %v824
        %1256 = vmatmul.mubr.f32.gmra.mrb[0].mxu0 %v823
        %v1257 = vpop.f32.mrb[0].mxu0
        %v1258 = vadd.f32 %v1123, %v1257
        %v1259 = vpop.f32.mrb[0].mxu0
        %1260 = vmatprep.mubr.f32.mxu0 %v832
        %1261 = vmatmul.mubr.f32.gmra.mrb[0].mxu0 %v831
        %v1262 = vpop.f32.mrb[0].mxu0
        %v1263 = vadd.f32 %v1128, %v1262
        %v1264 = vpop.f32.mrb[0].mxu0
        %1265 = vmatprep.mubr.f32.mxu0 %v840
        %1266 = vmatmul.mubr.f32.gmra.mrb[0].mxu0 %v839
        %v1267 = vpop.f32.mrb[0].mxu0
        %v1268 = vadd.f32 %v1133, %v1267
        %v1269 = vpop.f32.mrb[0].mxu0
        %1270 = vmatprep.mubr.f32.mxu0 %v848
        %1271 = vmatmul.mubr.f32.gmra.mrb[0].mxu0 %v847
        %v1272 = vpop.f32.mrb[0].mxu0
        %v1273 = vadd.f32 %v1138, %v1272
        %v1274 = vpop.f32.mrb[0].mxu0
        %1275 = vmatprep.mubr.f32.mxu0 %v856
        %1276 = vmatmul.mubr.f32.gmra.mrb[0].mxu0 %v855
        %v1277 = vpop.f32.mrb[0].mxu0
        %v1278 = vadd.f32 %v1143, %v1277
        %v1279 = vpop.f32.mrb[0].mxu0
        %1280 = vmatprep.mubr.f32.mxu0 %v864
        %1281 = vmatmul.mubr.f32.gmra.mrb[0].mxu0 %v863
        %v1282 = vpop.f32.mrb[0].mxu0
        %v1283 = vadd.f32 %v1148, %v1282
        %v1284 = vpop.f32.mrb[0].mxu0
        %1285 = vmatprep.mubr.f32.mxu0 %v872
        %1286 = vmatmul.mubr.f32.gmra.mrb[0].mxu0 %v871
        %v1287 = vpop.f32.mrb[0].mxu0
        %v1288 = vadd.f32 %v1153, %v1287
        %v1289 = vpop.f32.mrb[0].mxu0
        %1290 = vmatprep.mubr.f32.mxu0 %v880
        %1291 = vmatmul.mubr.f32.gmra.mrb[0].mxu0 %v879
        %v1292 = vpop.f32.mrb[0].mxu0
        %v1293 = vadd.f32 %v1158, %v1292
        %v1294 = vpop.f32.mrb[0].mxu0
        %1295 = vmatprep.mubr.f32.mxu0 %v888
        %1296 = vmatmul.mubr.f32.gmra.mrb[0].mxu0 %v887
        %v1297 = vpop.f32.mrb[0].mxu0
        %v1298 = vadd.f32 %v1163, %v1297
        %v1299 = vpop.f32.mrb[0].mxu0
        %1300 = vmatprep.mubr.f32.mxu0 %v896
        %1301 = vmatmul.mubr.f32.gmra.mrb[0].mxu0 %v895
        %v1302 = vpop.f32.mrb[0].mxu0
        %v1303 = vadd.f32 %v1168, %v1302
        %v1304 = vpop.f32.mrb[0].mxu0
        %1305 = vdwg.mxu0
        %1306 = vmatprep.subr.mxu0 0.0
        %1307 = vmatpush1.msra.mxu0 %v965
        %1308 = vmatprep.subr.mxu0 0.0
        %1309 = vmatpush1.msra.mxu0 %v966
        %1310 = vmatprep.subr.mxu0 0.0
        %1311 = vmatpush1.msra.mxu0 %v967
        %1312 = vmatprep.subr.mxu0 0.0
        %1313 = vmatpush1.msra.mxu0 %v968
        %1314 = vmatprep.subr.mxu0 0.0
        %1315 = vmatpush1.msra.mxu0 %v969
        %1316 = vmatprep.subr.mxu0 0.0
        %1317 = vmatpush1.msra.mxu0 %v970
        %1318 = vmatprep.subr.mxu0 0.0
        %1319 = vmatpush1.msra.mxu0 %v971
        %1320 = vmatprep.subr.mxu0 0.0
        %1321 = vmatpush1.msra.mxu0 %v972
        %1322 = vmatprep.subr.mxu0 0.0
        %1323 = vmatpush1.msra.mxu0 %v973
        %1324 = vmatprep.subr.mxu0 0.0
        %1325 = vmatpush1.msra.mxu0 %v974
        %1326 = vmatprep.subr.mxu0 0.0
        %1327 = vmatpush1.msra.mxu0 %v975
        %1328 = vmatprep.subr.mxu0 0.0
        %1329 = vmatpush1.msra.mxu0 %v976
        %1330 = vmatprep.subr.mxu0 0.0
        %1331 = vmatpush1.msra.mxu0 %v977
        %1332 = vmatprep.subr.mxu0 0.0
        %1333 = vmatpush1.msra.mxu0 %v978
        %1334 = vmatprep.subr.mxu0 0.0
        %1335 = vmatpush1.msra.mxu0 %v979
        %1336 = vmatprep.subr.mxu0 0.0
        %1337 = vmatpush1.msra.mxu0 %v980
        %1338 = vmatprep.subr.mxu0 0.0
        %1339 = vmatpush1.msra.mxu0 %v981
        %1340 = vmatprep.subr.mxu0 0.0
        %1341 = vmatpush1.msra.mxu0 %v982
        %1342 = vmatprep.subr.mxu0 0.0
        %1343 = vmatpush1.msra.mxu0 %v983
        %1344 = vmatprep.subr.mxu0 0.0
        %1345 = vmatpush1.msra.mxu0 %v984
        %1346 = vmatprep.subr.mxu0 0.0
        %1347 = vmatpush1.msra.mxu0 %v985
        %1348 = vmatprep.subr.mxu0 0.0
        %1349 = vmatpush1.msra.mxu0 %v986
        %1350 = vmatprep.subr.mxu0 0.0
        %1351 = vmatpush1.msra.mxu0 %v987
        %1352 = vmatprep.subr.mxu0 0.0
        %1353 = vmatpush1.msra.mxu0 %v988
        %1354 = vmatprep.subr.mxu0 0.0
        %1355 = vmatpush1.msra.mxu0 %v989
        %1356 = vmatprep.subr.mxu0 0.0
        %1357 = vmatpush1.msra.mxu0 %v990
        %1358 = vmatprep.subr.mxu0 0.0
        %1359 = vmatpush1.msra.mxu0 %v991
        %1360 = vmatprep.subr.mxu0 0.0
        %1361 = vmatpush1.msra.mxu0 %v992
        %1362 = vmatprep.subr.mxu0 0.0
        %1363 = vmatpush1.msra.mxu0 %v993
        %1364 = vmatprep.subr.mxu0 0.0
        %1365 = vmatpush1.msra.mxu0 %v994
        %1366 = vmatprep.subr.mxu0 0.0
        %1367 = vmatpush1.msra.mxu0 %v995
        %1368 = vmatprep.subr.mxu0 0.0
        %1369 = vmatpush1.msra.mxu0 %v996
        %1370 = vmatprep.mubr.f32.mxu0 %v794
        %1371 = vmatmul.mubr.f32.gmra.mrb[0].mxu0 %v793
        %v1372 = vpop.f32.mrb[0].mxu0
        %v1373 = vadd.f32 %v1238, %v1372
        %v1374 = vpop.f32.mrb[0].mxu0
        %1375 = vmatprep.mubr.f32.mxu0 %v802
        %1376 = vmatmul.mubr.f32.gmra.mrb[0].mxu0 %v801
        %v1377 = vpop.f32.mrb[0].mxu0
        %v1378 = vadd.f32 %v1243, %v1377
        %v1379 = vpop.f32.mrb[0].mxu0
        %1380 = vmatprep.mubr.f32.mxu0 %v810
        %1381 = vmatmul.mubr.f32.gmra.mrb[0].mxu0 %v809
        %v1382 = vpop.f32.mrb[0].mxu0
        %v1383 = vadd.f32 %v1248, %v1382
        %v1384 = vpop.f32.mrb[0].mxu0
        %1385 = vmatprep.mubr.f32.mxu0 %v818
        %1386 = vmatmul.mubr.f32.gmra.mrb[0].mxu0 %v817
        %v1387 = vpop.f32.mrb[0].mxu0
        %v1388 = vadd.f32 %v1253, %v1387
        %v1389 = vpop.f32.mrb[0].mxu0
        %1390 = vmatprep.mubr.f32.mxu0 %v826
        %1391 = vmatmul.mubr.f32.gmra.mrb[0].mxu0 %v825
        %v1392 = vpop.f32.mrb[0].mxu0
        %v1393 = vadd.f32 %v1258, %v1392
        %v1394 = vpop.f32.mrb[0].mxu0
        %1395 = vmatprep.mubr.f32.mxu0 %v834
        %1396 = vmatmul.mubr.f32.gmra.mrb[0].mxu0 %v833
        %v1397 = vpop.f32.mrb[0].mxu0
        %v1398 = vadd.f32 %v1263, %v1397
        %v1399 = vpop.f32.mrb[0].mxu0
        %1400 = vmatprep.mubr.f32.mxu0 %v842
        %1401 = vmatmul.mubr.f32.gmra.mrb[0].mxu0 %v841
        %v1402 = vpop.f32.mrb[0].mxu0
        %v1403 = vadd.f32 %v1268, %v1402
        %v1404 = vpop.f32.mrb[0].mxu0
        %1405 = vmatprep.mubr.f32.mxu0 %v850
        %1406 = vmatmul.mubr.f32.gmra.mrb[0].mxu0 %v849
        %v1407 = vpop.f32.mrb[0].mxu0
        %v1408 = vadd.f32 %v1273, %v1407
        %v1409 = vpop.f32.mrb[0].mxu0
        %1410 = vmatprep.mubr.f32.mxu0 %v858
        %1411 = vmatmul.mubr.f32.gmra.mrb[0].mxu0 %v857
        %v1412 = vpop.f32.mrb[0].mxu0
        %v1413 = vadd.f32 %v1278, %v1412
        %v1414 = vpop.f32.mrb[0].mxu0
        %1415 = vmatprep.mubr.f32.mxu0 %v866
        %1416 = vmatmul.mubr.f32.gmra.mrb[0].mxu0 %v865
        %v1417 = vpop.f32.mrb[0].mxu0
        %v1418 = vadd.f32 %v1283, %v1417
        %v1419 = vpop.f32.mrb[0].mxu0
        %1420 = vmatprep.mubr.f32.mxu0 %v874
        %1421 = vmatmul.mubr.f32.gmra.mrb[0].mxu0 %v873
        %v1422 = vpop.f32.mrb[0].mxu0
        %v1423 = vadd.f32 %v1288, %v1422
        %v1424 = vpop.f32.mrb[0].mxu0
        %1425 = vmatprep.mubr.f32.mxu0 %v882
        %1426 = vmatmul.mubr.f32.gmra.mrb[0].mxu0 %v881
        %v1427 = vpop.f32.mrb[0].mxu0
        %v1428 = vadd.f32 %v1293, %v1427
        %v1429 = vpop.f32.mrb[0].mxu0
        %1430 = vmatprep.mubr.f32.mxu0 %v890
        %1431 = vmatmul.mubr.f32.gmra.mrb[0].mxu0 %v889
        %v1432 = vpop.f32.mrb[0].mxu0
        %v1433 = vadd.f32 %v1298, %v1432
        %v1434 = vpop.f32.mrb[0].mxu0
        %1435 = vmatprep.mubr.f32.mxu0 %v898
        %1436 = vmatmul.mubr.f32.gmra.mrb[0].mxu0 %v897
        %v1437 = vpop.f32.mrb[0].mxu0
        %v1438 = vadd.f32 %v1303, %v1437
        %v1439 = vpop.f32.mrb[0].mxu0
        %1440 = vdwg.mxu0
        %1441 = vmatprep.subr.mxu0 0.0
        %1442 = vmatpush1.msra.mxu0 %v997
        %1443 = vmatprep.subr.mxu0 0.0
        %1444 = vmatpush1.msra.mxu0 %v998
        %1445 = vmatprep.subr.mxu0 0.0
        %1446 = vmatpush1.msra.mxu0 %v999
        %1447 = vmatprep.subr.mxu0 0.0
        %1448 = vmatpush1.msra.mxu0 %v1000
        %1449 = vmatprep.subr.mxu0 0.0
        %1450 = vmatpush1.msra.mxu0 %v1001
        %1451 = vmatprep.subr.mxu0 0.0
        %1452 = vmatpush1.msra.mxu0 %v1002
        %1453 = vmatprep.subr.mxu0 0.0
        %1454 = vmatpush1.msra.mxu0 %v1003
        %1455 = vmatprep.subr.mxu0 0.0
        %1456 = vmatpush1.msra.mxu0 %v1004
        %1457 = vmatprep.subr.mxu0 0.0
        %1458 = vmatpush1.msra.mxu0 %v1005
        %1459 = vmatprep.subr.mxu0 0.0
        %1460 = vmatpush1.msra.mxu0 %v1006
        %1461 = vmatprep.subr.mxu0 0.0
        %1462 = vmatpush1.msra.mxu0 %v1007
        %1463 = vmatprep.subr.mxu0 0.0
        %1464 = vmatpush1.msra.mxu0 %v1008
        %1465 = vmatprep.subr.mxu0 0.0
        %1466 = vmatpush1.msra.mxu0 %v1009
        %1467 = vmatprep.subr.mxu0 0.0
        %1468 = vmatpush1.msra.mxu0 %v1010
        %1469 = vmatprep.subr.mxu0 0.0
        %1470 = vmatpush1.msra.mxu0 %v1011
        %1471 = vmatprep.subr.mxu0 0.0
        %1472 = vmatpush1.msra.mxu0 %v1012
        %1473 = vmatprep.subr.mxu0 0.0
        %1474 = vmatpush1.msra.mxu0 %v1013
        %1475 = vmatprep.subr.mxu0 0.0
        %1476 = vmatpush1.msra.mxu0 %v1014
        %1477 = vmatprep.subr.mxu0 0.0
        %1478 = vmatpush1.msra.mxu0 %v1015
        %1479 = vmatprep.subr.mxu0 0.0
        %1480 = vmatpush1.msra.mxu0 %v1016
        %1481 = vmatprep.subr.mxu0 0.0
        %1482 = vmatpush1.msra.mxu0 %v1017
        %1483 = vmatprep.subr.mxu0 0.0
        %1484 = vmatpush1.msra.mxu0 %v1018
        %1485 = vmatprep.subr.mxu0 0.0
        %1486 = vmatpush1.msra.mxu0 %v1019
        %1487 = vmatprep.subr.mxu0 0.0
        %1488 = vmatpush1.msra.mxu0 %v1020
        %1489 = vmatprep.subr.mxu0 0.0
        %1490 = vmatpush1.msra.mxu0 %v1021
        %1491 = vmatprep.subr.mxu0 0.0
        %1492 = vmatpush1.msra.mxu0 %v1022
        %1493 = vmatprep.subr.mxu0 0.0
        %1494 = vmatpush1.msra.mxu0 %v1023
        %1495 = vmatprep.subr.mxu0 0.0
        %1496 = vmatpush1.msra.mxu0 %v1024
        %1497 = vmatprep.subr.mxu0 0.0
        %1498 = vmatpush1.msra.mxu0 %v1025
        %1499 = vmatprep.subr.mxu0 0.0
        %1500 = vmatpush1.msra.mxu0 %v1026
        %1501 = vmatprep.subr.mxu0 0.0
        %1502 = vmatpush1.msra.mxu0 %v1027
        %1503 = vmatprep.subr.mxu0 0.0
        %1504 = vmatpush1.msra.mxu0 %v1028
        %1505 = vmatprep.mubr.f32.mxu0 %v796
        %1506 = vmatmul.mubr.f32.gmra.mrb[0].mxu0 %v795
        %v1507 = vpop.f32.mrb[0].mxu0
        %v1508 = vadd.f32 %v1373, %v1507
        %v1509 = vpop.f32.mrb[0].mxu0
        %1510 = vmatprep.mubr.f32.mxu0 %v804
        %1511 = vmatmul.mubr.f32.gmra.mrb[0].mxu0 %v803
        %v1512 = vpop.f32.mrb[0].mxu0
        %v1513 = vadd.f32 %v1378, %v1512
        %v1514 = vpop.f32.mrb[0].mxu0
        %1515 = vmatprep.mubr.f32.mxu0 %v812
        %1516 = vmatmul.mubr.f32.gmra.mrb[0].mxu0 %v811
        %v1517 = vpop.f32.mrb[0].mxu0
        %v1518 = vadd.f32 %v1383, %v1517
        %v1519 = vpop.f32.mrb[0].mxu0
        %1520 = vmatprep.mubr.f32.mxu0 %v820
        %1521 = vmatmul.mubr.f32.gmra.mrb[0].mxu0 %v819
        %v1522 = vpop.f32.mrb[0].mxu0
        %v1523 = vadd.f32 %v1388, %v1522
        %v1524 = vpop.f32.mrb[0].mxu0
        %1525 = vmatprep.mubr.f32.mxu0 %v828
        %1526 = vmatmul.mubr.f32.gmra.mrb[0].mxu0 %v827
        %v1527 = vpop.f32.mrb[0].mxu0
        %v1528 = vadd.f32 %v1393, %v1527
        %v1529 = vpop.f32.mrb[0].mxu0
        %1530 = vmatprep.mubr.f32.mxu0 %v836
        %1531 = vmatmul.mubr.f32.gmra.mrb[0].mxu0 %v835
        %v1532 = vpop.f32.mrb[0].mxu0
        %v1533 = vadd.f32 %v1398, %v1532
        %v1534 = vpop.f32.mrb[0].mxu0
        %1535 = vmatprep.mubr.f32.mxu0 %v844
        %1536 = vmatmul.mubr.f32.gmra.mrb[0].mxu0 %v843
        %v1537 = vpop.f32.mrb[0].mxu0
        %v1538 = vadd.f32 %v1403, %v1537
        %v1539 = vpop.f32.mrb[0].mxu0
        %1540 = vmatprep.mubr.f32.mxu0 %v852
        %1541 = vmatmul.mubr.f32.gmra.mrb[0].mxu0 %v851
        %v1542 = vpop.f32.mrb[0].mxu0
        %v1543 = vadd.f32 %v1408, %v1542
        %v1544 = vpop.f32.mrb[0].mxu0
        %1545 = vmatprep.mubr.f32.mxu0 %v860
        %1546 = vmatmul.mubr.f32.gmra.mrb[0].mxu0 %v859
        %v1547 = vpop.f32.mrb[0].mxu0
        %v1548 = vadd.f32 %v1413, %v1547
        %v1549 = vpop.f32.mrb[0].mxu0
        %1550 = vmatprep.mubr.f32.mxu0 %v868
        %1551 = vmatmul.mubr.f32.gmra.mrb[0].mxu0 %v867
        %v1552 = vpop.f32.mrb[0].mxu0
        %v1553 = vadd.f32 %v1418, %v1552
        %v1554 = vpop.f32.mrb[0].mxu0
        %1555 = vmatprep.mubr.f32.mxu0 %v876
        %1556 = vmatmul.mubr.f32.gmra.mrb[0].mxu0 %v875
        %v1557 = vpop.f32.mrb[0].mxu0
        %v1558 = vadd.f32 %v1423, %v1557
        %v1559 = vpop.f32.mrb[0].mxu0
        %1560 = vmatprep.mubr.f32.mxu0 %v884
        %1561 = vmatmul.mubr.f32.gmra.mrb[0].mxu0 %v883
        %v1562 = vpop.f32.mrb[0].mxu0
        %v1563 = vadd.f32 %v1428, %v1562
        %v1564 = vpop.f32.mrb[0].mxu0
        %1565 = vmatprep.mubr.f32.mxu0 %v892
        %1566 = vmatmul.mubr.f32.gmra.mrb[0].mxu0 %v891
        %v1567 = vpop.f32.mrb[0].mxu0
        %v1568 = vadd.f32 %v1433, %v1567
        %v1569 = vpop.f32.mrb[0].mxu0
        %1570 = vmatprep.mubr.f32.mxu0 %v900
        %1571 = vmatmul.mubr.f32.gmra.mrb[0].mxu0 %v899
        %v1572 = vpop.f32.mrb[0].mxu0
        %v1573 = vadd.f32 %v1438, %v1572
        %v1574 = vpop.f32.mrb[0].mxu0
        %1575 = vdwg.mxu0
        %v1576 = vld [vmem:[%s3] sm:$0xff]
        %v1577 = vld [vmem:[%s3 + $0x8] sm:$0xff]
        %v1578 = vld [vmem:[%s3 + $0x10] sm:$0xff]
        %v1579 = vld [vmem:[%s3 + $0x18] sm:$0xff]
        %v1580 = vld [vmem:[%s3 + $0x20] sm:$0xff]
        %v1581 = vld [vmem:[%s3 + $0x28] sm:$0xff]
        %v1582 = vld [vmem:[%s3 + $0x30] sm:$0xff]
        %v1583 = vld [vmem:[%s3 + $0x38] sm:$0xff]
        %v1584 = vld [vmem:[%s3 + $0x40] sm:$0xff]
        %v1585 = vld [vmem:[%s3 + $0x48] sm:$0xff]
        %v1586 = vld [vmem:[%s3 + $0x50] sm:$0xff]
        %v1587 = vld [vmem:[%s3 + $0x58] sm:$0xff]
        %v1588 = vld [vmem:[%s3 + $0x60] sm:$0xff]
        %v1589 = vld [vmem:[%s3 + $0x68] sm:$0xff]
        %1590 = vxpose.xlu0.b32.start [1/16] %v1508, 128
        %1591 = vxpose.xlu0.b32.cont [2/16] %v1513, 128
        %1592 = vxpose.xlu0.b32.cont [3/16] %v1518, 128
        %1593 = vxpose.xlu0.b32.cont [4/16] %v1523, 128
        %1594 = vxpose.xlu0.b32.cont [5/16] %v1528, 128
        %1595 = vxpose.xlu0.b32.cont [6/16] %v1533, 128
        %1596 = vxpose.xlu0.b32.cont [7/16] %v1538, 128
        %1597 = vxpose.xlu0.b32.cont [8/16] 0.0, 128
        %1598 = vxpose.xlu0.b32.cont [9/16] 0.0, 128
        %1599 = vxpose.xlu0.b32.cont [10/16] 0.0, 128
        %1600 = vxpose.xlu0.b32.cont [11/16] 0.0, 128
        %1601 = vxpose.xlu0.b32.cont [12/16] 0.0, 128
        %1602 = vxpose.xlu0.b32.cont [13/16] 0.0, 128
        %1603 = vxpose.xlu0.b32.cont [14/16] 0.0, 128
        %1604 = vxpose.xlu0.b32.cont [15/16] 0.0, 128
        %1605 = vxpose.xlu0.b32.end [16/16] 0.0, 128
        %v1606 = vpop.trf.xlu0
        %v1607 = vpop.trf.xlu0
        %v1608 = vpop.trf.xlu0
        %v1609 = vpop.trf.xlu0
        %v1610 = vpop.trf.xlu0
        %v1611 = vpop.trf.xlu0
        %v1612 = vpop.trf.xlu0
        %v1613 = vpop.trf.xlu0
        %v1614 = vpop.trf.xlu0
        %v1615 = vpop.trf.xlu0
        %v1616 = vpop.trf.xlu0
        %v1617 = vpop.trf.xlu0
        %v1618 = vpop.trf.xlu0
        %v1619 = vpop.trf.xlu0
        %v1620 = vpop.trf.xlu0
        %v1621 = vpop.trf.xlu0
        %vm1622 = vcmask 457728
        %v1624 = vsel %vm1622, %v1606, 0
        %v1627 = vsel %vm1622, %v1607, 0
        %v1630 = vsel %vm1622, %v1608, 0
        %v1633 = vsel %vm1622, %v1609, 0
        %v1636 = vsel %vm1622, %v1610, 0
        %v1639 = vsel %vm1622, %v1611, 0
        %v1642 = vsel %vm1622, %v1612, 0
        %v1645 = vsel %vm1622, %v1613, 0
        %v1648 = vsel %vm1622, %v1614, 0
        %v1651 = vsel %vm1622, %v1615, 0
        %v1654 = vsel %vm1622, %v1616, 0
        %v1657 = vsel %vm1622, %v1617, 0
        %v1660 = vsel %vm1622, %v1618, 0
        %v1663 = vsel %vm1622, %v1619, 0
        %v1666 = vsel %vm1622, %v1620, 0
        %v1669 = vsel %vm1622, %v1621, 0
        %1671 = vmatprep.subr.mxu0 %v1577
        %1672 = vmatpush1.msra.mxu0 %v1576
        %1673 = vmatprep.subr.mxu0 %v1579
        %1674 = vmatpush1.msra.mxu0 %v1578
        %1675 = vmatprep.subr.mxu0 %v1581
        %1676 = vmatpush1.msra.mxu0 %v1580
        %1677 = vmatprep.subr.mxu0 %v1583
        %1678 = vmatpush1.msra.mxu0 %v1582
        %1679 = vmatprep.subr.mxu0 %v1585
        %1680 = vmatpush1.msra.mxu0 %v1584
        %1681 = vmatprep.subr.mxu0 %v1587
        %1682 = vmatpush1.msra.mxu0 %v1586
        %1683 = vmatprep.subr.mxu0 %v1589
        %1684 = vmatpush1.msra.mxu0 %v1588
        %1685 = vmatprep.subr.mxu0 0.0
        %1686 = vmatpush1.msra.mxu0 0.0
        %1687 = vmatprep.subr.mxu0 0.0
        %1688 = vmatpush1.msra.mxu0 0.0
        %1689 = vmatprep.subr.mxu0 0.0
        %1690 = vmatpush1.msra.mxu0 0.0
        %1691 = vmatprep.subr.mxu0 0.0
        %1692 = vmatpush1.msra.mxu0 0.0
        %1693 = vmatprep.subr.mxu0 0.0
        %1694 = vmatpush1.msra.mxu0 0.0
        %1695 = vmatprep.subr.mxu0 0.0
        %1696 = vmatpush1.msra.mxu0 0.0
        %1697 = vmatprep.subr.mxu0 0.0
        %1698 = vmatpush1.msra.mxu0 0.0
        %1699 = vmatprep.subr.mxu0 0.0
        %1700 = vmatpush1.msra.mxu0 0.0
        %1701 = vmatprep.subr.mxu0 0.0
        %1702 = vmatpush1.msra.mxu0 0.0
        %1703 = vmatprep.subr.mxu0 0.0
        %1704 = vmatpush1.msra.mxu0 0.0
        %1705 = vmatprep.subr.mxu0 0.0
        %1706 = vmatpush1.msra.mxu0 0.0
        %1707 = vmatprep.subr.mxu0 0.0
        %1708 = vmatpush1.msra.mxu0 0.0
        %1709 = vmatprep.subr.mxu0 0.0
        %1710 = vmatpush1.msra.mxu0 0.0
        %1711 = vmatprep.subr.mxu0 0.0
        %1712 = vmatpush1.msra.mxu0 0.0
        %1713 = vmatprep.subr.mxu0 0.0
        %1714 = vmatpush1.msra.mxu0 0.0
        %1715 = vmatprep.subr.mxu0 0.0
        %1716 = vmatpush1.msra.mxu0 0.0
        %1717 = vmatprep.subr.mxu0 0.0
        %1718 = vmatpush1.msra.mxu0 0.0
        %1719 = vmatprep.subr.mxu0 0.0
        %1720 = vmatpush1.msra.mxu0 0.0
        %1721 = vmatprep.subr.mxu0 0.0
        %1722 = vmatpush1.msra.mxu0 0.0
        %1723 = vmatprep.subr.mxu0 0.0
        %1724 = vmatpush1.msra.mxu0 0.0
        %1725 = vmatprep.subr.mxu0 0.0
        %1726 = vmatpush1.msra.mxu0 0.0
        %1727 = vmatprep.subr.mxu0 0.0
        %1728 = vmatpush1.msra.mxu0 0.0
        %1729 = vmatprep.subr.mxu0 0.0
        %1730 = vmatpush1.msra.mxu0 0.0
        %1731 = vmatprep.subr.mxu0 0.0
        %1732 = vmatpush1.msra.mxu0 0.0
        %1733 = vmatprep.subr.mxu0 0.0
        %1734 = vmatpush1.msra.mxu0 0.0
        %1735 = vmatprep.mubr.f32.mxu0 0.0
        %1736 = vmatmul.mubr.f32.gmra.mrb[0].mxu0 %v1624
        %v1737 = vpop.f32.mrb[0].mxu0
        %v1738 = vadd.f32 0.0, %v1737
        %v1739 = vpop.f32.mrb[0].mxu0
        %v1740 = vadd.f32 0.0, %v1739
        %1741 = vmatprep.mubr.f32.mxu0 0.0
        %1742 = vmatmul.mubr.f32.gmra.mrb[0].mxu0 %v1627
        %v1743 = vpop.f32.mrb[0].mxu0
        %v1744 = vadd.f32 0.0, %v1743
        %v1745 = vpop.f32.mrb[0].mxu0
        %v1746 = vadd.f32 0.0, %v1745
        %1747 = vmatprep.mubr.f32.mxu0 0.0
        %1748 = vmatmul.mubr.f32.gmra.mrb[0].mxu0 %v1630
        %v1749 = vpop.f32.mrb[0].mxu0
        %v1750 = vadd.f32 0.0, %v1749
        %v1751 = vpop.f32.mrb[0].mxu0
        %v1752 = vadd.f32 0.0, %v1751
        %1753 = vmatprep.mubr.f32.mxu0 0.0
        %1754 = vmatmul.mubr.f32.gmra.mrb[0].mxu0 %v1633
        %v1755 = vpop.f32.mrb[0].mxu0
        %v1756 = vadd.f32 0.0, %v1755
        %v1757 = vpop.f32.mrb[0].mxu0
        %v1758 = vadd.f32 0.0, %v1757
        %1759 = vmatprep.mubr.f32.mxu0 0.0
        %1760 = vmatmul.mubr.f32.gmra.mrb[0].mxu0 %v1636
        %v1761 = vpop.f32.mrb[0].mxu0
        %v1762 = vadd.f32 0.0, %v1761
        %v1763 = vpop.f32.mrb[0].mxu0
        %v1764 = vadd.f32 0.0, %v1763
        %1765 = vmatprep.mubr.f32.mxu0 0.0
        %1766 = vmatmul.mubr.f32.gmra.mrb[0].mxu0 %v1639
        %v1767 = vpop.f32.mrb[0].mxu0
        %v1768 = vadd.f32 0.0, %v1767
        %v1769 = vpop.f32.mrb[0].mxu0
        %v1770 = vadd.f32 0.0, %v1769
        %1771 = vmatprep.mubr.f32.mxu0 0.0
        %1772 = vmatmul.mubr.f32.gmra.mrb[0].mxu0 %v1642
        %v1773 = vpop.f32.mrb[0].mxu0
        %v1774 = vadd.f32 0.0, %v1773
        %v1775 = vpop.f32.mrb[0].mxu0
        %v1776 = vadd.f32 0.0, %v1775
        %1777 = vmatprep.mubr.f32.mxu0 0.0
        %1778 = vmatmul.mubr.f32.gmra.mrb[0].mxu0 %v1645
        %v1779 = vpop.f32.mrb[0].mxu0
        %v1780 = vadd.f32 0.0, %v1779
        %v1781 = vpop.f32.mrb[0].mxu0
        %v1782 = vadd.f32 0.0, %v1781
        %1783 = vmatprep.mubr.f32.mxu0 0.0
        %1784 = vmatmul.mubr.f32.gmra.mrb[0].mxu0 %v1648
        %v1785 = vpop.f32.mrb[0].mxu0
        %v1786 = vadd.f32 0.0, %v1785
        %v1787 = vpop.f32.mrb[0].mxu0
        %v1788 = vadd.f32 0.0, %v1787
        %1789 = vmatprep.mubr.f32.mxu0 0.0
        %1790 = vmatmul.mubr.f32.gmra.mrb[0].mxu0 %v1651
        %v1791 = vpop.f32.mrb[0].mxu0
        %v1792 = vadd.f32 0.0, %v1791
        %v1793 = vpop.f32.mrb[0].mxu0
        %v1794 = vadd.f32 0.0, %v1793
        %1795 = vmatprep.mubr.f32.mxu0 0.0
        %1796 = vmatmul.mubr.f32.gmra.mrb[0].mxu0 %v1654
        %v1797 = vpop.f32.mrb[0].mxu0
        %v1798 = vadd.f32 0.0, %v1797
        %v1799 = vpop.f32.mrb[0].mxu0
        %v1800 = vadd.f32 0.0, %v1799
        %1801 = vmatprep.mubr.f32.mxu0 0.0
        %1802 = vmatmul.mubr.f32.gmra.mrb[0].mxu0 %v1657
        %v1803 = vpop.f32.mrb[0].mxu0
        %v1804 = vadd.f32 0.0, %v1803
        %v1805 = vpop.f32.mrb[0].mxu0
        %v1806 = vadd.f32 0.0, %v1805
        %1807 = vmatprep.mubr.f32.mxu0 0.0
        %1808 = vmatmul.mubr.f32.gmra.mrb[0].mxu0 %v1660
        %v1809 = vpop.f32.mrb[0].mxu0
        %v1810 = vadd.f32 0.0, %v1809
        %v1811 = vpop.f32.mrb[0].mxu0
        %v1812 = vadd.f32 0.0, %v1811
        %1813 = vmatprep.mubr.f32.mxu0 0.0
        %1814 = vmatmul.mubr.f32.gmra.mrb[0].mxu0 %v1663
        %v1815 = vpop.f32.mrb[0].mxu0
        %v1816 = vadd.f32 0.0, %v1815
        %v1817 = vpop.f32.mrb[0].mxu0
        %v1818 = vadd.f32 0.0, %v1817
        %1819 = vmatprep.mubr.f32.mxu0 0.0
        %1820 = vmatmul.mubr.f32.gmra.mrb[0].mxu0 %v1666
        %v1821 = vpop.f32.mrb[0].mxu0
        %v1822 = vadd.f32 0.0, %v1821
        %v1823 = vpop.f32.mrb[0].mxu0
        %v1824 = vadd.f32 0.0, %v1823
        %1825 = vmatprep.mubr.f32.mxu0 0.0
        %1826 = vmatmul.mubr.f32.gmra.mrb[0].mxu0 %v1669
        %v1827 = vpop.f32.mrb[0].mxu0
        %v1828 = vadd.f32 0.0, %v1827
        %v1829 = vpop.f32.mrb[0].mxu0
        %v1830 = vadd.f32 0.0, %v1829
        %1831 = vdwg.mxu0
        %1832 = vst [vmem:[%s776] sm:$0xff] %v1738
        %vm1833 = vcmask 334848
        %1834 = vst.msk [vmem:[%s776 + $0x8] sm:$0xff] %vm1833, %v1740
        %1835 = vst [vmem:[%s776 + $0x10] sm:$0xff] %v1744
        %1836 = vst.msk [vmem:[%s776 + $0x18] sm:$0xff] %vm1833, %v1746
        %1837 = vst [vmem:[%s776 + $0x20] sm:$0xff] %v1750
        %1838 = vst.msk [vmem:[%s776 + $0x28] sm:$0xff] %vm1833, %v1752
        %1839 = vst [vmem:[%s776 + $0x30] sm:$0xff] %v1756
        %1840 = vst.msk [vmem:[%s776 + $0x38] sm:$0xff] %vm1833, %v1758
        %1841 = vst [vmem:[%s776 + $0x40] sm:$0xff] %v1762
        %1842 = vst.msk [vmem:[%s776 + $0x48] sm:$0xff] %vm1833, %v1764
        %1843 = vst [vmem:[%s776 + $0x50] sm:$0xff] %v1768
        %1844 = vst.msk [vmem:[%s776 + $0x58] sm:$0xff] %vm1833, %v1770
        %1845 = vst [vmem:[%s776 + $0x60] sm:$0xff] %v1774
        %1846 = vst.msk [vmem:[%s776 + $0x68] sm:$0xff] %vm1833, %v1776
        %1847 = vst [vmem:[%s776 + $0x70] sm:$0xff] %v1780
        %1848 = vst.msk [vmem:[%s776 + $0x78] sm:$0xff] %vm1833, %v1782
        %1849 = vst [vmem:[%s776 + $0x80] sm:$0xff] %v1786
        %1850 = vst.msk [vmem:[%s776 + $0x88] sm:$0xff] %vm1833, %v1788
        %1851 = vst [vmem:[%s776 + $0x90] sm:$0xff] %v1792
        %1852 = vst.msk [vmem:[%s776 + $0x98] sm:$0xff] %vm1833, %v1794
        %1853 = vst [vmem:[%s776 + $0xa0] sm:$0xff] %v1798
        %1854 = vst.msk [vmem:[%s776 + $0xa8] sm:$0xff] %vm1833, %v1800
        %1855 = vst [vmem:[%s776 + $0xb0] sm:$0xff] %v1804
        %1856 = vst.msk [vmem:[%s776 + $0xb8] sm:$0xff] %vm1833, %v1806
        %1857 = vst [vmem:[%s776 + $0xc0] sm:$0xff] %v1810
        %1858 = vst.msk [vmem:[%s776 + $0xc8] sm:$0xff] %vm1833, %v1812
        %1859 = vst [vmem:[%s776 + $0xd0] sm:$0xff] %v1816
        %1860 = vst.msk [vmem:[%s776 + $0xd8] sm:$0xff] %vm1833, %v1818
        %1861 = vst [vmem:[%s776 + $0xe0] sm:$0xff] %v1822
        %1862 = vst.msk [vmem:[%s776 + $0xe8] sm:$0xff] %vm1833, %v1824
        %1863 = vst [vmem:[%s776 + $0xf0] sm:$0xff] %v1828
        %1864 = vst.msk [vmem:[%s776 + $0xf8] sm:$0xff] %vm1833, %v1830
        %1865 = vxpose.xlu0.b32.start [1/16] %v1543, 128
        %1866 = vxpose.xlu0.b32.cont [2/16] %v1548, 128
        %1867 = vxpose.xlu0.b32.cont [3/16] %v1553, 128
        %1868 = vxpose.xlu0.b32.cont [4/16] %v1558, 128
        %1869 = vxpose.xlu0.b32.cont [5/16] %v1563, 128
        %1870 = vxpose.xlu0.b32.cont [6/16] %v1568, 128
        %1871 = vxpose.xlu0.b32.cont [7/16] %v1573, 128
        %1872 = vxpose.xlu0.b32.cont [8/16] 0.0, 128
        %1873 = vxpose.xlu0.b32.cont [9/16] 0.0, 128
        %1874 = vxpose.xlu0.b32.cont [10/16] 0.0, 128
        %1875 = vxpose.xlu0.b32.cont [11/16] 0.0, 128
        %1876 = vxpose.xlu0.b32.cont [12/16] 0.0, 128
        %1877 = vxpose.xlu0.b32.cont [13/16] 0.0, 128
        %1878 = vxpose.xlu0.b32.cont [14/16] 0.0, 128
        %1879 = vxpose.xlu0.b32.cont [15/16] 0.0, 128
        %1880 = vxpose.xlu0.b32.end [16/16] 0.0, 128
        %v1881 = vpop.trf.xlu0
        %v1882 = vpop.trf.xlu0
        %v1883 = vpop.trf.xlu0
        %v1884 = vpop.trf.xlu0
        %v1885 = vpop.trf.xlu0
        %v1886 = vpop.trf.xlu0
        %v1887 = vpop.trf.xlu0
        %v1888 = vpop.trf.xlu0
        %v1889 = vpop.trf.xlu0
        %v1890 = vpop.trf.xlu0
        %v1891 = vpop.trf.xlu0
        %v1892 = vpop.trf.xlu0
        %v1893 = vpop.trf.xlu0
        %v1894 = vpop.trf.xlu0
        %v1895 = vpop.trf.xlu0
        %v1896 = vpop.trf.xlu0
        %v1898 = vsel %vm1622, %v1881, 0
        %v1901 = vsel %vm1622, %v1882, 0
        %v1904 = vsel %vm1622, %v1883, 0
        %v1907 = vsel %vm1622, %v1884, 0
        %v1910 = vsel %vm1622, %v1885, 0
        %v1913 = vsel %vm1622, %v1886, 0
        %v1916 = vsel %vm1622, %v1887, 0
        %v1919 = vsel %vm1622, %v1888, 0
        %v1922 = vsel %vm1622, %v1889, 0
        %v1925 = vsel %vm1622, %v1890, 0
        %v1928 = vsel %vm1622, %v1891, 0
        %v1931 = vsel %vm1622, %v1892, 0
        %v1934 = vsel %vm1622, %v1893, 0
        %v1937 = vsel %vm1622, %v1894, 0
        %v1940 = vsel %vm1622, %v1895, 0
        %v1943 = vsel %vm1622, %v1896, 0
        %1945 = vmatprep.subr.mxu0 %v1577
        %1946 = vmatpush1.msra.mxu0 %v1576
        %1947 = vmatprep.subr.mxu0 %v1579
        %1948 = vmatpush1.msra.mxu0 %v1578
        %1949 = vmatprep.subr.mxu0 %v1581
        %1950 = vmatpush1.msra.mxu0 %v1580
        %1951 = vmatprep.subr.mxu0 %v1583
        %1952 = vmatpush1.msra.mxu0 %v1582
        %1953 = vmatprep.subr.mxu0 %v1585
        %1954 = vmatpush1.msra.mxu0 %v1584
        %1955 = vmatprep.subr.mxu0 %v1587
        %1956 = vmatpush1.msra.mxu0 %v1586
        %1957 = vmatprep.subr.mxu0 %v1589
        %1958 = vmatpush1.msra.mxu0 %v1588
        %1959 = vmatprep.subr.mxu0 0.0
        %1960 = vmatpush1.msra.mxu0 0.0
        %1961 = vmatprep.subr.mxu0 0.0
        %1962 = vmatpush1.msra.mxu0 0.0
        %1963 = vmatprep.subr.mxu0 0.0
        %1964 = vmatpush1.msra.mxu0 0.0
        %1965 = vmatprep.subr.mxu0 0.0
        %1966 = vmatpush1.msra.mxu0 0.0
        %1967 = vmatprep.subr.mxu0 0.0
        %1968 = vmatpush1.msra.mxu0 0.0
        %1969 = vmatprep.subr.mxu0 0.0
        %1970 = vmatpush1.msra.mxu0 0.0
        %1971 = vmatprep.subr.mxu0 0.0
        %1972 = vmatpush1.msra.mxu0 0.0
        %1973 = vmatprep.subr.mxu0 0.0
        %1974 = vmatpush1.msra.mxu0 0.0
        %1975 = vmatprep.subr.mxu0 0.0
        %1976 = vmatpush1.msra.mxu0 0.0
        %1977 = vmatprep.subr.mxu0 0.0
        %1978 = vmatpush1.msra.mxu0 0.0
        %1979 = vmatprep.subr.mxu0 0.0
        %1980 = vmatpush1.msra.mxu0 0.0
        %1981 = vmatprep.subr.mxu0 0.0
        %1982 = vmatpush1.msra.mxu0 0.0
        %1983 = vmatprep.subr.mxu0 0.0
        %1984 = vmatpush1.msra.mxu0 0.0
        %1985 = vmatprep.subr.mxu0 0.0
        %1986 = vmatpush1.msra.mxu0 0.0
        %1987 = vmatprep.subr.mxu0 0.0
        %1988 = vmatpush1.msra.mxu0 0.0
        %1989 = vmatprep.subr.mxu0 0.0
        %1990 = vmatpush1.msra.mxu0 0.0
        %1991 = vmatprep.subr.mxu0 0.0
        %1992 = vmatpush1.msra.mxu0 0.0
        %1993 = vmatprep.subr.mxu0 0.0
        %1994 = vmatpush1.msra.mxu0 0.0
        %1995 = vmatprep.subr.mxu0 0.0
        %1996 = vmatpush1.msra.mxu0 0.0
        %1997 = vmatprep.subr.mxu0 0.0
        %1998 = vmatpush1.msra.mxu0 0.0
        %1999 = vmatprep.subr.mxu0 0.0
        %2000 = vmatpush1.msra.mxu0 0.0
        %2001 = vmatprep.subr.mxu0 0.0
        %2002 = vmatpush1.msra.mxu0 0.0
        %2003 = vmatprep.subr.mxu0 0.0
        %2004 = vmatpush1.msra.mxu0 0.0
        %2005 = vmatprep.subr.mxu0 0.0
        %2006 = vmatpush1.msra.mxu0 0.0
        %2007 = vmatprep.subr.mxu0 0.0
        %2008 = vmatpush1.msra.mxu0 0.0
        %2009 = vmatprep.mubr.f32.mxu0 0.0
        %2010 = vmatmul.mubr.f32.gmra.mrb[0].mxu0 %v1898
        %v2011 = vpop.f32.mrb[0].mxu0
        %v2012 = vadd.f32 0.0, %v2011
        %v2013 = vpop.f32.mrb[0].mxu0
        %v2014 = vadd.f32 0.0, %v2013
        %2015 = vmatprep.mubr.f32.mxu0 0.0
        %2016 = vmatmul.mubr.f32.gmra.mrb[0].mxu0 %v1901
        %v2017 = vpop.f32.mrb[0].mxu0
        %v2018 = vadd.f32 0.0, %v2017
        %v2019 = vpop.f32.mrb[0].mxu0
        %v2020 = vadd.f32 0.0, %v2019
        %2021 = vmatprep.mubr.f32.mxu0 0.0
        %2022 = vmatmul.mubr.f32.gmra.mrb[0].mxu0 %v1904
        %v2023 = vpop.f32.mrb[0].mxu0
        %v2024 = vadd.f32 0.0, %v2023
        %v2025 = vpop.f32.mrb[0].mxu0
        %v2026 = vadd.f32 0.0, %v2025
        %2027 = vmatprep.mubr.f32.mxu0 0.0
        %2028 = vmatmul.mubr.f32.gmra.mrb[0].mxu0 %v1907
        %v2029 = vpop.f32.mrb[0].mxu0
        %v2030 = vadd.f32 0.0, %v2029
        %v2031 = vpop.f32.mrb[0].mxu0
        %v2032 = vadd.f32 0.0, %v2031
        %2033 = vmatprep.mubr.f32.mxu0 0.0
        %2034 = vmatmul.mubr.f32.gmra.mrb[0].mxu0 %v1910
        %v2035 = vpop.f32.mrb[0].mxu0
        %v2036 = vadd.f32 0.0, %v2035
        %v2037 = vpop.f32.mrb[0].mxu0
        %v2038 = vadd.f32 0.0, %v2037
        %2039 = vmatprep.mubr.f32.mxu0 0.0
        %2040 = vmatmul.mubr.f32.gmra.mrb[0].mxu0 %v1913
        %v2041 = vpop.f32.mrb[0].mxu0
        %v2042 = vadd.f32 0.0, %v2041
        %v2043 = vpop.f32.mrb[0].mxu0
        %v2044 = vadd.f32 0.0, %v2043
        %2045 = vmatprep.mubr.f32.mxu0 0.0
        %2046 = vmatmul.mubr.f32.gmra.mrb[0].mxu0 %v1916
        %v2047 = vpop.f32.mrb[0].mxu0
        %v2048 = vadd.f32 0.0, %v2047
        %v2049 = vpop.f32.mrb[0].mxu0
        %v2050 = vadd.f32 0.0, %v2049
        %2051 = vmatprep.mubr.f32.mxu0 0.0
        %2052 = vmatmul.mubr.f32.gmra.mrb[0].mxu0 %v1919
        %v2053 = vpop.f32.mrb[0].mxu0
        %v2054 = vadd.f32 0.0, %v2053
        %v2055 = vpop.f32.mrb[0].mxu0
        %v2056 = vadd.f32 0.0, %v2055
        %2057 = vmatprep.mubr.f32.mxu0 0.0
        %2058 = vmatmul.mubr.f32.gmra.mrb[0].mxu0 %v1922
        %v2059 = vpop.f32.mrb[0].mxu0
        %v2060 = vadd.f32 0.0, %v2059
        %v2061 = vpop.f32.mrb[0].mxu0
        %v2062 = vadd.f32 0.0, %v2061
        %2063 = vmatprep.mubr.f32.mxu0 0.0
        %2064 = vmatmul.mubr.f32.gmra.mrb[0].mxu0 %v1925
        %v2065 = vpop.f32.mrb[0].mxu0
        %v2066 = vadd.f32 0.0, %v2065
        %v2067 = vpop.f32.mrb[0].mxu0
        %v2068 = vadd.f32 0.0, %v2067
        %2069 = vmatprep.mubr.f32.mxu0 0.0
        %2070 = vmatmul.mubr.f32.gmra.mrb[0].mxu0 %v1928
        %v2071 = vpop.f32.mrb[0].mxu0
        %v2072 = vadd.f32 0.0, %v2071
        %v2073 = vpop.f32.mrb[0].mxu0
        %v2074 = vadd.f32 0.0, %v2073
        %2075 = vmatprep.mubr.f32.mxu0 0.0
        %2076 = vmatmul.mubr.f32.gmra.mrb[0].mxu0 %v1931
        %v2077 = vpop.f32.mrb[0].mxu0
        %v2078 = vadd.f32 0.0, %v2077
        %v2079 = vpop.f32.mrb[0].mxu0
        %v2080 = vadd.f32 0.0, %v2079
        %2081 = vmatprep.mubr.f32.mxu0 0.0
        %2082 = vmatmul.mubr.f32.gmra.mrb[0].mxu0 %v1934
        %v2083 = vpop.f32.mrb[0].mxu0
        %v2084 = vadd.f32 0.0, %v2083
        %v2085 = vpop.f32.mrb[0].mxu0
        %v2086 = vadd.f32 0.0, %v2085
        %2087 = vmatprep.mubr.f32.mxu0 0.0
        %2088 = vmatmul.mubr.f32.gmra.mrb[0].mxu0 %v1937
        %v2089 = vpop.f32.mrb[0].mxu0
        %v2090 = vadd.f32 0.0, %v2089
        %v2091 = vpop.f32.mrb[0].mxu0
        %v2092 = vadd.f32 0.0, %v2091
        %2093 = vmatprep.mubr.f32.mxu0 0.0
        %2094 = vmatmul.mubr.f32.gmra.mrb[0].mxu0 %v1940
        %v2095 = vpop.f32.mrb[0].mxu0
        %v2096 = vadd.f32 0.0, %v2095
        %v2097 = vpop.f32.mrb[0].mxu0
        %v2098 = vadd.f32 0.0, %v2097
        %2099 = vmatprep.mubr.f32.mxu0 0.0
        %2100 = vmatmul.mubr.f32.gmra.mrb[0].mxu0 %v1943
        %v2101 = vpop.f32.mrb[0].mxu0
        %v2102 = vadd.f32 0.0, %v2101
        %v2103 = vpop.f32.mrb[0].mxu0
        %v2104 = vadd.f32 0.0, %v2103
        %2105 = vdwg.mxu0
        %s2106 = scalar_lea.vmem %s776, 256 [#allocation3]
        %2107 = vst [vmem:[%s2106] sm:$0xff] %v2012
        %2108 = vst.msk [vmem:[%s2106 + $0x8] sm:$0xff] %vm1833, %v2014
        %2109 = vst [vmem:[%s2106 + $0x10] sm:$0xff] %v2018
        %2110 = vst.msk [vmem:[%s2106 + $0x18] sm:$0xff] %vm1833, %v2020
        %2111 = vst [vmem:[%s2106 + $0x20] sm:$0xff] %v2024
        %2112 = vst.msk [vmem:[%s2106 + $0x28] sm:$0xff] %vm1833, %v2026
        %2113 = vst [vmem:[%s2106 + $0x30] sm:$0xff] %v2030
        %2114 = vst.msk [vmem:[%s2106 + $0x38] sm:$0xff] %vm1833, %v2032
        %2115 = vst [vmem:[%s2106 + $0x40] sm:$0xff] %v2036
        %2116 = vst.msk [vmem:[%s2106 + $0x48] sm:$0xff] %vm1833, %v2038
        %2117 = vst [vmem:[%s2106 + $0x50] sm:$0xff] %v2042
        %2118 = vst.msk [vmem:[%s2106 + $0x58] sm:$0xff] %vm1833, %v2044
        %2119 = vst [vmem:[%s2106 + $0x60] sm:$0xff] %v2048
        %2120 = vst.msk [vmem:[%s2106 + $0x68] sm:$0xff] %vm1833, %v2050
        %2121 = vst [vmem:[%s2106 + $0x70] sm:$0xff] %v2054
        %2122 = vst.msk [vmem:[%s2106 + $0x78] sm:$0xff] %vm1833, %v2056
        %2123 = vst [vmem:[%s2106 + $0x80] sm:$0xff] %v2060
        %2124 = vst.msk [vmem:[%s2106 + $0x88] sm:$0xff] %vm1833, %v2062
        %2125 = vst [vmem:[%s2106 + $0x90] sm:$0xff] %v2066
        %2126 = vst.msk [vmem:[%s2106 + $0x98] sm:$0xff] %vm1833, %v2068
        %2127 = vst [vmem:[%s2106 + $0xa0] sm:$0xff] %v2072
        %2128 = vst.msk [vmem:[%s2106 + $0xa8] sm:$0xff] %vm1833, %v2074
        %2129 = vst [vmem:[%s2106 + $0xb0] sm:$0xff] %v2078
        %2130 = vst.msk [vmem:[%s2106 + $0xb8] sm:$0xff] %vm1833, %v2080
        %2131 = vst [vmem:[%s2106 + $0xc0] sm:$0xff] %v2084
        %2132 = vst.msk [vmem:[%s2106 + $0xc8] sm:$0xff] %vm1833, %v2086
        %2133 = vst [vmem:[%s2106 + $0xd0] sm:$0xff] %v2090
        %2134 = vst.msk [vmem:[%s2106 + $0xd8] sm:$0xff] %vm1833, %v2092
        %2135 = vst [vmem:[%s2106 + $0xe0] sm:$0xff] %v2096
        %2136 = vst.msk [vmem:[%s2106 + $0xe8] sm:$0xff] %vm1833, %v2098
        %2137 = vst [vmem:[%s2106 + $0xf0] sm:$0xff] %v2102
        %2138 = vst.msk [vmem:[%s2106 + $0xf8] sm:$0xff] %vm1833, %v2104
        %s2139 = sand.u32 %s136, 1
        %s2140 = sand.u32 %s136, 1
        %s2141 = smul.addr %s2140, 512
        %s2142 = scalar_lea.vmem [#allocation3], %s2141
        // Predicated region
        $region75: #{merge_feature_i3d.1} parent=69 // pred_check
          %p2143 = pneg %p146
        $region76: #{merge_feature_i3d.1} parent=69 // pred_check_branch
          %2145 = sbr.rel (%p2143) target = $region78
        $region77: #{merge_feature_i3d.1} parent=69 // pred_region
          %s2146 = smul.u32 2, %s20
          %s2147 = smul.u32 16, %s19
          %s2148 = smul.addr %s2147, 2
          %s2149 = smul.addr %s2146, 64
          %s2150 = sadd.s32 %s2148, %s2149
          %s2151 = smul.addr %s2150, 8
          %s2152 = scalar_lea.vmem %s4, %s2151
          // Predicated region
          $region79: #{merge_feature_i3d.1} parent=77 // pred_check
            _
          $region80: #{merge_feature_i3d.1} parent=77 // pred_check_branch
            %2154 = sbr.rel (0) target = $region82
          $region81: #{merge_feature_i3d.1} parent=77 // pred_region
            // Predicated region
            $region83: #{merge_feature_i3d.1} parent=81 // pred_check
              _
            $region84: #{merge_feature_i3d.1} parent=81 // pred_check_branch
              %2156 = sbr.rel (0) target = $region86
            $region85: #{merge_feature_i3d.1} parent=81 // pred_region
              loop: start=0, step=1, limit=1
              $region87: #{merge_feature_i3d.1} parent=85 // loop_pre_header
                _
              $region88: #{merge_feature_i3d.1} parent=85 // loop_header
                %s2158 = sphi 0, %s2162
                %p2159 = scmp.ge.s32.totalorder %s2158, 1
                %s2163 = sphi %s2142, %s2142
                %s2164 = sphi %s2152, %s2152
              $region89: #{merge_feature_i3d.1} parent=85 // loop_header_branch
                %2161 = sbr.rel (%p2159) target = $region93
              $region90: #{merge_feature_i3d.1} parent=85 // loop_body
                %v2165 = vld [vmem:[%s2163] sm:$0xff]
                %2166 = vst [vmem:[%s2164] sm:$0xff] %v2165
                %v2167 = vld [vmem:[%s2163 + $0x8] sm:$0xff]
                %2168 = vst [vmem:[%s2164 + $0x8] sm:$0xff] %v2167
                %v2169 = vld [vmem:[%s2163 + $0x10] sm:$0xff]
                %2170 = vst [vmem:[%s2164 + $0x10] sm:$0xff] %v2169
                %v2171 = vld [vmem:[%s2163 + $0x18] sm:$0xff]
                %2172 = vst [vmem:[%s2164 + $0x18] sm:$0xff] %v2171
                %v2173 = vld [vmem:[%s2163 + $0x20] sm:$0xff]
                %2174 = vst [vmem:[%s2164 + $0x20] sm:$0xff] %v2173
                %v2175 = vld [vmem:[%s2163 + $0x28] sm:$0xff]
                %2176 = vst [vmem:[%s2164 + $0x28] sm:$0xff] %v2175
                %v2177 = vld [vmem:[%s2163 + $0x30] sm:$0xff]
                %2178 = vst [vmem:[%s2164 + $0x30] sm:$0xff] %v2177
                %v2179 = vld [vmem:[%s2163 + $0x38] sm:$0xff]
                %2180 = vst [vmem:[%s2164 + $0x38] sm:$0xff] %v2179
                %v2181 = vld [vmem:[%s2163 + $0x40] sm:$0xff]
                %2182 = vst [vmem:[%s2164 + $0x40] sm:$0xff] %v2181
                %v2183 = vld [vmem:[%s2163 + $0x48] sm:$0xff]
                %2184 = vst [vmem:[%s2164 + $0x48] sm:$0xff] %v2183
                %v2185 = vld [vmem:[%s2163 + $0x50] sm:$0xff]
                %2186 = vst [vmem:[%s2164 + $0x50] sm:$0xff] %v2185
                %v2187 = vld [vmem:[%s2163 + $0x58] sm:$0xff]
                %2188 = vst [vmem:[%s2164 + $0x58] sm:$0xff] %v2187
                %v2189 = vld [vmem:[%s2163 + $0x60] sm:$0xff]
                %2190 = vst [vmem:[%s2164 + $0x60] sm:$0xff] %v2189
                %v2191 = vld [vmem:[%s2163 + $0x68] sm:$0xff]
                %2192 = vst [vmem:[%s2164 + $0x68] sm:$0xff] %v2191
                %v2193 = vld [vmem:[%s2163 + $0x70] sm:$0xff]
                %2194 = vst [vmem:[%s2164 + $0x70] sm:$0xff] %v2193
                %v2195 = vld [vmem:[%s2163 + $0x78] sm:$0xff]
                %2196 = vst [vmem:[%s2164 + $0x78] sm:$0xff] %v2195
                %v2197 = vld [vmem:[%s2163 + $0x80] sm:$0xff]
                %2198 = vst [vmem:[%s2164 + $0x80] sm:$0xff] %v2197
                %v2199 = vld [vmem:[%s2163 + $0x88] sm:$0xff]
                %2200 = vst [vmem:[%s2164 + $0x88] sm:$0xff] %v2199
                %v2201 = vld [vmem:[%s2163 + $0x90] sm:$0xff]
                %2202 = vst [vmem:[%s2164 + $0x90] sm:$0xff] %v2201
                %v2203 = vld [vmem:[%s2163 + $0x98] sm:$0xff]
                %2204 = vst [vmem:[%s2164 + $0x98] sm:$0xff] %v2203
                %v2205 = vld [vmem:[%s2163 + $0xa0] sm:$0xff]
                %2206 = vst [vmem:[%s2164 + $0xa0] sm:$0xff] %v2205
                %v2207 = vld [vmem:[%s2163 + $0xa8] sm:$0xff]
                %2208 = vst [vmem:[%s2164 + $0xa8] sm:$0xff] %v2207
                %v2209 = vld [vmem:[%s2163 + $0xb0] sm:$0xff]
                %2210 = vst [vmem:[%s2164 + $0xb0] sm:$0xff] %v2209
                %v2211 = vld [vmem:[%s2163 + $0xb8] sm:$0xff]
                %2212 = vst [vmem:[%s2164 + $0xb8] sm:$0xff] %v2211
                %v2213 = vld [vmem:[%s2163 + $0xc0] sm:$0xff]
                %2214 = vst [vmem:[%s2164 + $0xc0] sm:$0xff] %v2213
                %v2215 = vld [vmem:[%s2163 + $0xc8] sm:$0xff]
                %2216 = vst [vmem:[%s2164 + $0xc8] sm:$0xff] %v2215
                %v2217 = vld [vmem:[%s2163 + $0xd0] sm:$0xff]
                %2218 = vst [vmem:[%s2164 + $0xd0] sm:$0xff] %v2217
                %v2219 = vld [vmem:[%s2163 + $0xd8] sm:$0xff]
                %2220 = vst [vmem:[%s2164 + $0xd8] sm:$0xff] %v2219
                %v2221 = vld [vmem:[%s2163 + $0xe0] sm:$0xff]
                %2222 = vst [vmem:[%s2164 + $0xe0] sm:$0xff] %v2221
                %v2223 = vld [vmem:[%s2163 + $0xe8] sm:$0xff]
                %2224 = vst [vmem:[%s2164 + $0xe8] sm:$0xff] %v2223
                %v2225 = vld [vmem:[%s2163 + $0xf0] sm:$0xff]
                %2226 = vst [vmem:[%s2164 + $0xf0] sm:$0xff] %v2225
                %v2227 = vld [vmem:[%s2163 + $0xf8] sm:$0xff]
                %2228 = vst [vmem:[%s2164 + $0xf8] sm:$0xff] %v2227
                %v2229 = vld [vmem:[%s2163 + $0x100] sm:$0xff]
                %2230 = vst [vmem:[%s2164 + $0x200] sm:$0xff] %v2229
                %v2231 = vld [vmem:[%s2163 + $0x108] sm:$0xff]
                %2232 = vst [vmem:[%s2164 + $0x208] sm:$0xff] %v2231
                %v2233 = vld [vmem:[%s2163 + $0x110] sm:$0xff]
                %2234 = vst [vmem:[%s2164 + $0x210] sm:$0xff] %v2233
                %v2235 = vld [vmem:[%s2163 + $0x118] sm:$0xff]
                %2236 = vst [vmem:[%s2164 + $0x218] sm:$0xff] %v2235
                %v2237 = vld [vmem:[%s2163 + $0x120] sm:$0xff]
                %2238 = vst [vmem:[%s2164 + $0x220] sm:$0xff] %v2237
                %v2239 = vld [vmem:[%s2163 + $0x128] sm:$0xff]
                %2240 = vst [vmem:[%s2164 + $0x228] sm:$0xff] %v2239
                %v2241 = vld [vmem:[%s2163 + $0x130] sm:$0xff]
                %2242 = vst [vmem:[%s2164 + $0x230] sm:$0xff] %v2241
                %v2243 = vld [vmem:[%s2163 + $0x138] sm:$0xff]
                %2244 = vst [vmem:[%s2164 + $0x238] sm:$0xff] %v2243
                %v2245 = vld [vmem:[%s2163 + $0x140] sm:$0xff]
                %2246 = vst [vmem:[%s2164 + $0x240] sm:$0xff] %v2245
                %v2247 = vld [vmem:[%s2163 + $0x148] sm:$0xff]
                %2248 = vst [vmem:[%s2164 + $0x248] sm:$0xff] %v2247
                %v2249 = vld [vmem:[%s2163 + $0x150] sm:$0xff]
                %2250 = vst [vmem:[%s2164 + $0x250] sm:$0xff] %v2249
                %v2251 = vld [vmem:[%s2163 + $0x158] sm:$0xff]
                %2252 = vst [vmem:[%s2164 + $0x258] sm:$0xff] %v2251
                %v2253 = vld [vmem:[%s2163 + $0x160] sm:$0xff]
                %2254 = vst [vmem:[%s2164 + $0x260] sm:$0xff] %v2253
                %v2255 = vld [vmem:[%s2163 + $0x168] sm:$0xff]
                %2256 = vst [vmem:[%s2164 + $0x268] sm:$0xff] %v2255
                %v2257 = vld [vmem:[%s2163 + $0x170] sm:$0xff]
                %2258 = vst [vmem:[%s2164 + $0x270] sm:$0xff] %v2257
                %v2259 = vld [vmem:[%s2163 + $0x178] sm:$0xff]
                %2260 = vst [vmem:[%s2164 + $0x278] sm:$0xff] %v2259
                %v2261 = vld [vmem:[%s2163 + $0x180] sm:$0xff]
                %2262 = vst [vmem:[%s2164 + $0x280] sm:$0xff] %v2261
                %v2263 = vld [vmem:[%s2163 + $0x188] sm:$0xff]
                %2264 = vst [vmem:[%s2164 + $0x288] sm:$0xff] %v2263
                %v2265 = vld [vmem:[%s2163 + $0x190] sm:$0xff]
                %2266 = vst [vmem:[%s2164 + $0x290] sm:$0xff] %v2265
                %v2267 = vld [vmem:[%s2163 + $0x198] sm:$0xff]
                %2268 = vst [vmem:[%s2164 + $0x298] sm:$0xff] %v2267
                %v2269 = vld [vmem:[%s2163 + $0x1a0] sm:$0xff]
                %2270 = vst [vmem:[%s2164 + $0x2a0] sm:$0xff] %v2269
                %v2271 = vld [vmem:[%s2163 + $0x1a8] sm:$0xff]
                %2272 = vst [vmem:[%s2164 + $0x2a8] sm:$0xff] %v2271
                %v2273 = vld [vmem:[%s2163 + $0x1b0] sm:$0xff]
                %2274 = vst [vmem:[%s2164 + $0x2b0] sm:$0xff] %v2273
                %v2275 = vld [vmem:[%s2163 + $0x1b8] sm:$0xff]
                %2276 = vst [vmem:[%s2164 + $0x2b8] sm:$0xff] %v2275
                %v2277 = vld [vmem:[%s2163 + $0x1c0] sm:$0xff]
                %2278 = vst [vmem:[%s2164 + $0x2c0] sm:$0xff] %v2277
                %v2279 = vld [vmem:[%s2163 + $0x1c8] sm:$0xff]
                %2280 = vst [vmem:[%s2164 + $0x2c8] sm:$0xff] %v2279
                %v2281 = vld [vmem:[%s2163 + $0x1d0] sm:$0xff]
                %2282 = vst [vmem:[%s2164 + $0x2d0] sm:$0xff] %v2281
                %v2283 = vld [vmem:[%s2163 + $0x1d8] sm:$0xff]
                %2284 = vst [vmem:[%s2164 + $0x2d8] sm:$0xff] %v2283
                %v2285 = vld [vmem:[%s2163 + $0x1e0] sm:$0xff]
                %2286 = vst [vmem:[%s2164 + $0x2e0] sm:$0xff] %v2285
                %v2287 = vld [vmem:[%s2163 + $0x1e8] sm:$0xff]
                %2288 = vst [vmem:[%s2164 + $0x2e8] sm:$0xff] %v2287
                %v2289 = vld [vmem:[%s2163 + $0x1f0] sm:$0xff]
                %2290 = vst [vmem:[%s2164 + $0x2f0] sm:$0xff] %v2289
                %v2291 = vld [vmem:[%s2163 + $0x1f8] sm:$0xff]
                %2292 = vst [vmem:[%s2164 + $0x2f8] sm:$0xff] %v2291
              $region91: #{merge_feature_i3d.1} parent=85 // loop_footer
                %s2162 = sadd.s32 1, %s2158
              $region92: #{merge_feature_i3d.1} parent=85 // loop_footer_branch
                %2157 = sbr.rel target = $region88
              $region93: #{merge_feature_i3d.1} parent=85 // loop_exit
                _
            $region86: #{merge_feature_i3d.1} parent=81 // pred_fallthru
              _
            // Predicated region
            $region94: #{merge_feature_i3d.1} parent=81 // pred_check
              _
            $region95: #{merge_feature_i3d.1} parent=81 // pred_check_branch
              %2294 = sbr.rel target = $region97
            $region96: #{merge_feature_i3d.1} parent=81 // pred_region
              _
            $region97: #{merge_feature_i3d.1} parent=81 // pred_fallthru
              _
          $region82: #{merge_feature_i3d.1} parent=77 // pred_fallthru
            _
          %2295 = vnop
        $region78: #{merge_feature_i3d.1} parent=69 // pred_fallthru
          _
      $region70: #{merge_feature_i3d.1} parent=5 // pred_fallthru
        _
      %p2296 = scmp.le.s32.totalorder 2, %s10
      // Predicated region
      $region98: #{merge_feature_i3d.1} parent=5 // pred_check
        %p2297 = pneg %p2296
      $region99: #{merge_feature_i3d.1} parent=5 // pred_check_branch
        %2299 = sbr.rel (%p2297) target = $region101
      $region100: #{merge_feature_i3d.1} parent=5 // pred_region
        %s2300 = ssub.s32 %s10, 2
        // Predicated region
        $region102: #{merge_feature_i3d.1} parent=100 // pred_check
          %p2301 = pneg %p152
        $region103: #{merge_feature_i3d.1} parent=100 // pred_check_branch
          %2303 = sbr.rel (%p2301) target = $region105
        $region104: #{merge_feature_i3d.1} parent=100 // pred_region
          %s2304 = sand.u32 %s137, 1
          %s2305 = sand.u32 %s137, 1
          %s2306 = smul.addr %s2305, 512
          %s2307 = scalar_lea.vmem [#allocation3], %s2306
        $region105: #{merge_feature_i3d.1} parent=100 // pred_fallthru
          _
      $region101: #{merge_feature_i3d.1} parent=5 // pred_fallthru
        _
    $region6: #{merge_feature_i3d.1} parent=1 // loop_footer
      %s14 = sadd.s32 1, %s10
    $region7: #{merge_feature_i3d.1} parent=1 // loop_footer_branch
      %9 = sbr.rel target = $region3
    $region8: #{merge_feature_i3d.1} parent=1 // loop_exit
      _

</llo_original>
